<compile_context>
chip_gen: v5e
topology: v5e:2x2
jax: 0.10.0
libtpu: 0.0.40
codegen_flags: <defaults>
</compile_context>

<pallas_src>
import functools

import jax
import jax.numpy as jnp
import numpy as np
from jax.experimental import pallas as pl
from jax.experimental.pallas import tpu as pltpu

LN_EPS = 1e-5  # GPT2 layer_norm_epsilon / nn.LayerNorm default


def _gelu_new(x):
    # GPT-2 "gelu_new" activation
    return 0.5 * x * (1.0 + jnp.tanh(
        jnp.sqrt(2.0 / jnp.pi) * (x + 0.044715 * x * x * x)))


def _layernorm(x, w, b):
    mu = jnp.mean(x, axis=-1, keepdims=True)
    var = jnp.mean((x - mu) ** 2, axis=-1, keepdims=True)
    return (x - mu) * jax.lax.rsqrt(var + LN_EPS) * w + b


def transformer_kernel(n_head,
                       zs_ref, w_in_ref, b_in_ref, wpe_ref,
                       ln1w_ref, ln1b_ref, wqkv_ref, bqkv_ref,
                       waproj_ref, baproj_ref,
                       ln2w_ref, ln2b_ref, wfc_ref, bfc_ref,
                       wfproj_ref, bfproj_ref,
                       lnfw_ref, lnfb_ref, wout_ref, bout_ref,
                       out_ref):
    Bt, S, nd = zs_ref.shape
    D = w_in_ref.shape[1]
    L = wqkv_ref.shape[0]
    H = n_head
    Dh = D // H
    R = Bt * S                      # all batch-tile rows folded onto sublanes
    P = out_ref.shape[-1]           # lane-padded output width (multiple of 128)

    # ---- _read_in + positional embeddings ----
    zs = zs_ref[...].reshape(R, nd)
    x = jnp.dot(zs, w_in_ref[...], preferred_element_type=jnp.float32) + b_in_ref[...]
    x = (x.reshape(Bt, S, D) + wpe_ref[...][None]).reshape(R, D)

    # ---- constants hoisted out of the layer loop ----
    row = jax.lax.broadcasted_iota(jnp.int32, (S, S), 0)
    col = jax.lax.broadcasted_iota(jnp.int32, (S, S), 1)
    causal = (col <= row)[None]                 # (1, S, S), broadcasts over H*Bt
    neg = jnp.finfo(jnp.float32).min
    scale = 1.0 / (Dh ** 0.5)

    def split_heads(qkv2d, off):
        # qkv2d: (R, 3D); take head slices at lane offset `off` -> (H*Bt, S, Dh), head-major.
        return jnp.concatenate(
            [qkv2d[:, off + h * Dh: off + (h + 1) * Dh].reshape(Bt, S, Dh)
             for h in range(H)], axis=0)

    def merge_heads(ctx):
        # ctx: (H*Bt, S, Dh) head-major -> (R, D) with heads packed along lanes.
        return jnp.concatenate(
            [ctx[h * Bt:(h + 1) * Bt].reshape(R, Dh) for h in range(H)], axis=-1)

    def layer(l, x):
        # --- attention sub-block (pre-LN) ---
        h = _layernorm(x, ln1w_ref[l], ln1b_ref[l])
        qkv = jnp.dot(h, wqkv_ref[l], preferred_element_type=jnp.float32) + bqkv_ref[l]
        q = split_heads(qkv, 0)
        k = split_heads(qkv, D)
        v = split_heads(qkv, 2 * D)
        s = jnp.einsum("nqd,nkd->nqk", q, k,
                       preferred_element_type=jnp.float32) * scale
        s = jnp.where(causal, s, neg)
        s = s - jnp.max(s, axis=-1, keepdims=True)
        p = jnp.exp(s)
        p = p * pl.reciprocal(jnp.sum(p, axis=-1, keepdims=True), approx=True)
        ctx = jnp.einsum("nqk,nkd->nqd", p, v,
                         preferred_element_type=jnp.float32)
        attn = merge_heads(ctx)
        attn = jnp.dot(attn, waproj_ref[l],
                       preferred_element_type=jnp.float32) + baproj_ref[l]
        x = x + attn

        # --- MLP sub-block ---
        h = _layernorm(x, ln2w_ref[l], ln2b_ref[l])
        ff = jnp.dot(h, wfc_ref[l], preferred_element_type=jnp.float32) + bfc_ref[l]
        ff = _gelu_new(ff)
        ff = jnp.dot(ff, wfproj_ref[l],
                     preferred_element_type=jnp.float32) + bfproj_ref[l]
        return x + ff

    x = jax.lax.fori_loop(0, L, layer, x)

    # ---- final LN + _read_out into a lane-dense (padded) slab ----
    x = _layernorm(x, lnfw_ref[...], lnfb_ref[...])
    pred = jnp.dot(x, wout_ref[...], preferred_element_type=jnp.float32) + bout_ref[...]
    out_ref[...] = pred.reshape(Bt, S, P)


def model_forward(actions, rewards, params, n_head=4):
    """Pallas version of TransformerModel2.forward (inds=None path)."""
    B, S, dim = actions.shape
    # _combine: stack(actions, rewards, axis=2).view(B, S, 2*dim); for dim=1 this is concat.
    zs = jnp.concatenate([actions, rewards], axis=-1).astype(jnp.float32)   # (B, S, 2)
    wpe = params["wpe"][:S]
    n_arms = params["w_out"].shape[-1]
    D = params["w_in"].shape[1]

    # Lane-dense output: pad read_out to a multiple of 128 lanes (zeros), slice afterwards.
    P = ((n_arms + 127) // 128) * 128
    w_out_p = jnp.zeros((D, P), jnp.float32).at[:, :n_arms].set(params["w_out"])
    b_out_p = jnp.zeros((1, P), jnp.float32).at[:, :n_arms].set(params["b_out"])

    # Batch tile: fold as many batch elements per grid step as cleanly divides B (<= 8).
    bt = next(c for c in range(min(B, 8), 0, -1) if B % c == 0)

    weights = [
        params["w_in"], params["b_in"], wpe,
        params["ln1_w"], params["ln1_b"], params["w_qkv"], params["b_qkv"],
        params["w_aproj"], params["b_aproj"],
        params["ln2_w"], params["ln2_b"], params["w_fc"], params["b_fc"],
        params["w_fproj"], params["b_fproj"],
        params["lnf_w"], params["lnf_b"], w_out_p, b_out_p,
    ]

    in_specs = [pl.BlockSpec((bt, S, zs.shape[-1]), lambda b: (b, 0, 0))]
    for w in weights:
        nd = w.ndim
        in_specs.append(
            pl.BlockSpec(w.shape, (lambda nd_: (lambda b: (0,) * nd_))(nd)))

    kernel = functools.partial(transformer_kernel, n_head)
    out_p = pl.pallas_call(
        kernel,
        out_shape=jax.ShapeDtypeStruct((B, S, P), jnp.float32),
        grid_spec=pltpu.PrefetchScalarGridSpec(
            num_scalar_prefetch=0,
            grid=(B // bt,),
            in_specs=in_specs,
            out_specs=pl.BlockSpec((bt, S, P), lambda b: (b, 0, 0)),
        ),
        compiler_params=pltpu.CompilerParams(
            dimension_semantics=("parallel",),          # independent batch tiles (v7x 2 TCs)
            vmem_limit_bytes=32 * 1024 * 1024),         # raise v5e's 16 MiB scoped default
    )(zs, *weights)
    return out_p[..., :n_arms]


def model_forward_ref(actions, rewards, params, n_head=4):
    """Pure-JAX reference (mirrors HF GPT2Model math) for correctness check."""
    B, S, _ = actions.shape
    zs = jnp.concatenate([actions, rewards], axis=-1).astype(jnp.float32)
    D = params["w_in"].shape[1]
    H = n_head
    Dh = D // H
    L = params["w_qkv"].shape[0]

    x = zs @ params["w_in"] + params["b_in"]
    x = x + params["wpe"][:S][None]
    causal = jnp.tril(jnp.ones((S, S), dtype=bool))
    neg = jnp.finfo(jnp.float32).min
    for l in range(L):
        h = _layernorm(x, params["ln1_w"][l], params["ln1_b"][l])
        qkv = h @ params["w_qkv"][l] + params["b_qkv"][l]
        q, k, v = jnp.split(qkv, 3, axis=-1)
        q = q.reshape(B, S, H, Dh)
        k = k.reshape(B, S, H, Dh)
        v = v.reshape(B, S, H, Dh)
        scores = jnp.einsum("bqhd,bkhd->bhqk", q, k) / (Dh ** 0.5)
        scores = jnp.where(causal[None, None], scores, neg)
        p = jax.nn.softmax(scores, axis=-1)
        attn = jnp.einsum("bhqk,bkhd->bqhd", p, v).reshape(B, S, D)
        x = x + attn @ params["w_aproj"][l] + params["b_aproj"][l]
        h = _layernorm(x, params["ln2_w"][l], params["ln2_b"][l])
        ff = _gelu_new(h @ params["w_fc"][l] + params["b_fc"][l])
        x = x + ff @ params["w_fproj"][l] + params["b_fproj"][l]
    x = _layernorm(x, params["lnf_w"], params["lnf_b"])
    return x @ params["w_out"] + params["b_out"]


def init_params(key, *, n_dims, n_embd, n_layer, n_head, n_arms, n_positions):
    assert n_embd % n_head == 0
    D = n_embd
    keys = iter(jax.random.split(key, 32))

    def norm(shape, scale=0.02):
        return (scale * jax.random.normal(next(keys), shape)).astype(jnp.float32)

    return dict(
        w_in=norm((n_dims, D)),
        b_in=norm((1, D)),
        wpe=norm((n_positions, D)),
        ln1_w=1.0 + norm((n_layer, 1, D)),
        ln1_b=norm((n_layer, 1, D)),
        w_qkv=norm((n_layer, D, 3 * D)),
        b_qkv=norm((n_layer, 1, 3 * D)),
        w_aproj=norm((n_layer, D, D)),
        b_aproj=norm((n_layer, 1, D)),
        ln2_w=1.0 + norm((n_layer, 1, D)),
        ln2_b=norm((n_layer, 1, D)),
        w_fc=norm((n_layer, D, 4 * D)),
        b_fc=norm((n_layer, 1, 4 * D)),
        w_fproj=norm((n_layer, 4 * D, D)),
        b_fproj=norm((n_layer, 1, D)),
        lnf_w=1.0 + norm((1, D)),
        lnf_b=norm((1, D)),
        w_out=norm((D, n_arms)),
        b_out=norm((1, n_arms)),
    )


if __name__ == "__main__":
    key = jax.random.PRNGKey(0)
    kp, ka, kr = jax.random.split(key, 3)

    B, S = 2, 8
    n_arms, n_dims, n_embd, n_layer, n_head = 5, 2, 16, 8, 4

    params = init_params(kp, n_dims=n_dims, n_embd=n_embd, n_layer=n_layer,
                         n_head=n_head, n_arms=n_arms, n_positions=64)

    # actions/rewards shaped (B, S, 1) so _combine yields n_dims=2 features per token.
    actions = jax.random.randint(ka, (B, S, 1), 0, n_arms).astype(jnp.float32)
    rewards = jax.random.uniform(kr, (B, S, 1), dtype=jnp.float32)

    out = model_forward(actions, rewards, params, n_head=n_head)
    out = jax.block_until_ready(out)

    ref = model_forward_ref(actions, rewards, params, n_head=n_head)
    # Tolerance accounts for the approx (EUP) reciprocal in the softmax denominator.
    np.testing.assert_allclose(np.asarray(out), np.asarray(ref), rtol=2e-3, atol=2e-3)

    print("KERNEL_OK")
</pallas_src>

<mosaic_0001>
module attributes {stable_mosaic.version = 11 : i64} {
  func.func @transformer_kernel(%arg0: i32, %arg1: memref<2x8x2xf32, #tpu.memory_space<vmem>>, %arg2: memref<2x16xf32, #tpu.memory_space<vmem>>, %arg3: memref<1x16xf32, #tpu.memory_space<vmem>>, %arg4: memref<8x16xf32, #tpu.memory_space<vmem>>, %arg5: memref<8x1x16xf32, #tpu.memory_space<vmem>>, %arg6: memref<8x1x16xf32, #tpu.memory_space<vmem>>, %arg7: memref<8x16x48xf32, #tpu.memory_space<vmem>>, %arg8: memref<8x1x48xf32, #tpu.memory_space<vmem>>, %arg9: memref<8x16x16xf32, #tpu.memory_space<vmem>>, %arg10: memref<8x1x16xf32, #tpu.memory_space<vmem>>, %arg11: memref<8x1x16xf32, #tpu.memory_space<vmem>>, %arg12: memref<8x1x16xf32, #tpu.memory_space<vmem>>, %arg13: memref<8x16x64xf32, #tpu.memory_space<vmem>>, %arg14: memref<8x1x64xf32, #tpu.memory_space<vmem>>, %arg15: memref<8x64x16xf32, #tpu.memory_space<vmem>>, %arg16: memref<8x1x16xf32, #tpu.memory_space<vmem>>, %arg17: memref<1x16xf32, #tpu.memory_space<vmem>>, %arg18: memref<1x16xf32, #tpu.memory_space<vmem>>, %arg19: memref<16x128xf32, #tpu.memory_space<vmem>>, %arg20: memref<1x128xf32, #tpu.memory_space<vmem>>, %arg21: memref<2x8x128xf32, #tpu.memory_space<vmem>>) attributes {dimension_semantics = [#tpu.dimension_semantics<parallel>], iteration_bounds = array<i64: 1>, scalar_prefetch = 0 : i64, scratch_operands = 0 : i64, tpu.core_type = #tpu.core_type<tc>, window_params = [{transform_indices = @transform_0, window_bounds = array<i64: 2, 8, 2>}, {pipeline_mode = #tpu.pipeline_mode<synchronous>, transform_indices = @transform_1, window_bounds = array<i64: 2, 16>}, {pipeline_mode = #tpu.pipeline_mode<synchronous>, transform_indices = @transform_2, window_bounds = array<i64: 1, 16>}, {pipeline_mode = #tpu.pipeline_mode<synchronous>, transform_indices = @transform_3, window_bounds = array<i64: 8, 16>}, {pipeline_mode = #tpu.pipeline_mode<synchronous>, transform_indices = @transform_4, window_bounds = array<i64: 8, 1, 16>}, {pipeline_mode = #tpu.pipeline_mode<synchronous>, transform_indices = @transform_5, window_bounds = array<i64: 8, 1, 16>}, {pipeline_mode = #tpu.pipeline_mode<synchronous>, transform_indices = @transform_6, window_bounds = array<i64: 8, 16, 48>}, {pipeline_mode = #tpu.pipeline_mode<synchronous>, transform_indices = @transform_7, window_bounds = array<i64: 8, 1, 48>}, {pipeline_mode = #tpu.pipeline_mode<synchronous>, transform_indices = @transform_8, window_bounds = array<i64: 8, 16, 16>}, {pipeline_mode = #tpu.pipeline_mode<synchronous>, transform_indices = @transform_9, window_bounds = array<i64: 8, 1, 16>}, {pipeline_mode = #tpu.pipeline_mode<synchronous>, transform_indices = @transform_10, window_bounds = array<i64: 8, 1, 16>}, {pipeline_mode = #tpu.pipeline_mode<synchronous>, transform_indices = @transform_11, window_bounds = array<i64: 8, 1, 16>}, {pipeline_mode = #tpu.pipeline_mode<synchronous>, transform_indices = @transform_12, window_bounds = array<i64: 8, 16, 64>}, {pipeline_mode = #tpu.pipeline_mode<synchronous>, transform_indices = @transform_13, window_bounds = array<i64: 8, 1, 64>}, {pipeline_mode = #tpu.pipeline_mode<synchronous>, transform_indices = @transform_14, window_bounds = array<i64: 8, 64, 16>}, {pipeline_mode = #tpu.pipeline_mode<synchronous>, transform_indices = @transform_15, window_bounds = array<i64: 8, 1, 16>}, {pipeline_mode = #tpu.pipeline_mode<synchronous>, transform_indices = @transform_16, window_bounds = array<i64: 1, 16>}, {pipeline_mode = #tpu.pipeline_mode<synchronous>, transform_indices = @transform_17, window_bounds = array<i64: 1, 16>}, {pipeline_mode = #tpu.pipeline_mode<synchronous>, transform_indices = @transform_18, window_bounds = array<i64: 16, 128>}, {pipeline_mode = #tpu.pipeline_mode<synchronous>, transform_indices = @transform_19, window_bounds = array<i64: 1, 128>}, {transform_indices = @transform_20, window_bounds = array<i64: 2, 8, 128>}]} {
    %c0 = arith.constant 0 : index
    %c0_0 = arith.constant 0 : index
    %c0_1 = arith.constant 0 : index
    %0 = vector.load %arg1[%c0, %c0_0, %c0_1] : memref<2x8x2xf32, #tpu.memory_space<vmem>>, vector<2x8x2xf32>
    %1 = vector.shape_cast %0 : vector<2x8x2xf32> to vector<16x2xf32>
    %c0_2 = arith.constant 0 : index
    %c0_3 = arith.constant 0 : index
    %2 = vector.load %arg2[%c0_2, %c0_3] : memref<2x16xf32, #tpu.memory_space<vmem>>, vector<2x16xf32>
    %cst = arith.constant dense<0.000000e+00> : vector<16x16xf32>
    %3 = tpu.matmul %1, %2, %cst {dimension_numbers = #tpu.dot_dimension_numbers<[1], [0], [0], [1], [0, 0, 1, 1], [], []>} : vector<16x2xf32>, vector<2x16xf32>, vector<16x16xf32> -> vector<16x16xf32>
    %c0_4 = arith.constant 0 : index
    %c0_5 = arith.constant 0 : index
    %4 = vector.load %arg3[%c0_4, %c0_5] : memref<1x16xf32, #tpu.memory_space<vmem>>, vector<1x16xf32>
    %5 = vector.broadcast %4 : vector<1x16xf32> to vector<16x16xf32>
    %6 = arith.addf %3, %5 : vector<16x16xf32>
    %7 = vector.shape_cast %6 : vector<16x16xf32> to vector<2x8x16xf32>
    %c0_6 = arith.constant 0 : index
    %c0_7 = arith.constant 0 : index
    %8 = vector.load %arg4[%c0_6, %c0_7] : memref<8x16xf32, #tpu.memory_space<vmem>>, vector<8x16xf32>
    %9 = vector.shape_cast %8 : vector<8x16xf32> to vector<1x8x16xf32>
    %10 = vector.broadcast %9 : vector<1x8x16xf32> to vector<2x8x16xf32>
    %11 = arith.addf %7, %10 : vector<2x8x16xf32>
    %12 = vector.shape_cast %11 : vector<2x8x16xf32> to vector<16x16xf32>
    %13 = tpu.iota {dimensions = array<i32: 0>} : vector<8x8xi32>
    %14 = tpu.iota {dimensions = array<i32: 1>} : vector<8x8xi32>
    %15 = arith.cmpi sle, %14, %13 : vector<8x8xi32>
    %16 = vector.shape_cast %15 : vector<8x8xi1> to vector<1x8x8xi1>
    %c0_i32 = arith.constant 0 : i32
    %c8_i32 = arith.constant 8 : i32
    %17 = arith.addi %c0_i32, %c8_i32 : i32
    %c1_i32 = arith.constant 1 : i32
    %18 = scf.for %arg22 = %c0_i32 to %17 step %c1_i32 iter_args(%arg23 = %12) -> (vector<16x16xf32>)  : i32 {
      %50 = arith.index_cast %arg22 : i32 to index
      %c0_26 = arith.constant 0 : index
      %c0_27 = arith.constant 0 : index
      %51 = vector.load %arg5[%50, %c0_26, %c0_27] : memref<8x1x16xf32, #tpu.memory_space<vmem>>, vector<1x1x16xf32>
      %52 = vector.shape_cast %51 : vector<1x1x16xf32> to vector<1x16xf32>
      %53 = arith.index_cast %arg22 : i32 to index
      %c0_28 = arith.constant 0 : index
      %c0_29 = arith.constant 0 : index
      %54 = vector.load %arg6[%53, %c0_28, %c0_29] : memref<8x1x16xf32, #tpu.memory_space<vmem>>, vector<1x1x16xf32>
      %55 = vector.shape_cast %54 : vector<1x1x16xf32> to vector<1x16xf32>
      %cst_30 = arith.constant dense<0.000000e+00> : vector<16xf32>
      %56 = vector.multi_reduction <add>, %arg23, %cst_30 [1] : vector<16x16xf32> to vector<16xf32>
      %57 = vector.shape_cast %56 : vector<16xf32> to vector<16x1xf32>
      %cst_31 = arith.constant 1.600000e+01 : f32
      %58 = vector.broadcast %cst_31 : f32 to vector<16x1xf32>
      %59 = arith.divf %57, %58 : vector<16x1xf32>
      %60 = vector.broadcast %59 : vector<16x1xf32> to vector<16x16xf32>
      %61 = arith.subf %arg23, %60 : vector<16x16xf32>
      %62 = arith.mulf %61, %61 : vector<16x16xf32>
      %cst_32 = arith.constant dense<0.000000e+00> : vector<16xf32>
      %63 = vector.multi_reduction <add>, %62, %cst_32 [1] : vector<16x16xf32> to vector<16xf32>
      %64 = vector.shape_cast %63 : vector<16xf32> to vector<16x1xf32>
      %cst_33 = arith.constant 1.600000e+01 : f32
      %65 = vector.broadcast %cst_33 : f32 to vector<16x1xf32>
      %66 = arith.divf %64, %65 : vector<16x1xf32>
      %67 = vector.broadcast %59 : vector<16x1xf32> to vector<16x16xf32>
      %68 = arith.subf %arg23, %67 : vector<16x16xf32>
      %cst_34 = arith.constant 9.99999974E-6 : f32
      %69 = vector.broadcast %cst_34 : f32 to vector<16x1xf32>
      %70 = arith.addf %66, %69 : vector<16x1xf32>
      %71 = math.rsqrt %70 : vector<16x1xf32>
      %72 = vector.broadcast %71 : vector<16x1xf32> to vector<16x16xf32>
      %73 = arith.mulf %68, %72 : vector<16x16xf32>
      %74 = vector.broadcast %52 : vector<1x16xf32> to vector<16x16xf32>
      %75 = arith.mulf %73, %74 : vector<16x16xf32>
      %76 = vector.broadcast %55 : vector<1x16xf32> to vector<16x16xf32>
      %77 = arith.addf %75, %76 : vector<16x16xf32>
      %78 = arith.index_cast %arg22 : i32 to index
      %c0_35 = arith.constant 0 : index
      %c0_36 = arith.constant 0 : index
      %79 = vector.load %arg7[%78, %c0_35, %c0_36] : memref<8x16x48xf32, #tpu.memory_space<vmem>>, vector<1x16x48xf32>
      %80 = vector.shape_cast %79 : vector<1x16x48xf32> to vector<16x48xf32>
      %cst_37 = arith.constant dense<0.000000e+00> : vector<16x48xf32>
      %81 = tpu.matmul %77, %80, %cst_37 {dimension_numbers = #tpu.dot_dimension_numbers<[1], [0], [0], [1], [0, 0, 1, 1], [], []>} : vector<16x16xf32>, vector<16x48xf32>, vector<16x48xf32> -> vector<16x48xf32>
      %82 = arith.index_cast %arg22 : i32 to index
      %c0_38 = arith.constant 0 : index
      %c0_39 = arith.constant 0 : index
      %83 = vector.load %arg8[%82, %c0_38, %c0_39] : memref<8x1x48xf32, #tpu.memory_space<vmem>>, vector<1x1x48xf32>
      %84 = vector.shape_cast %83 : vector<1x1x48xf32> to vector<1x48xf32>
      %85 = vector.broadcast %84 : vector<1x48xf32> to vector<16x48xf32>
      %86 = arith.addf %81, %85 : vector<16x48xf32>
      %87 = vector.extract_strided_slice %86 {offsets = [0, 0], sizes = [16, 4], strides = [1, 1]} : vector<16x48xf32> to vector<16x4xf32>
      %88 = vector.shape_cast %87 : vector<16x4xf32> to vector<2x8x4xf32>
      %89 = vector.extract_strided_slice %86 {offsets = [0, 4], sizes = [16, 4], strides = [1, 1]} : vector<16x48xf32> to vector<16x4xf32>
      %90 = vector.shape_cast %89 : vector<16x4xf32> to vector<2x8x4xf32>
      %91 = vector.extract_strided_slice %86 {offsets = [0, 8], sizes = [16, 4], strides = [1, 1]} : vector<16x48xf32> to vector<16x4xf32>
      %92 = vector.shape_cast %91 : vector<16x4xf32> to vector<2x8x4xf32>
      %93 = vector.extract_strided_slice %86 {offsets = [0, 12], sizes = [16, 4], strides = [1, 1]} : vector<16x48xf32> to vector<16x4xf32>
      %94 = vector.shape_cast %93 : vector<16x4xf32> to vector<2x8x4xf32>
      %95 = tpu.concatenate %88, %90, %92, %94 in 0 : vector<2x8x4xf32>, vector<2x8x4xf32>, vector<2x8x4xf32>, vector<2x8x4xf32> -> vector<8x8x4xf32>
      %96 = vector.extract_strided_slice %86 {offsets = [0, 16], sizes = [16, 4], strides = [1, 1]} : vector<16x48xf32> to vector<16x4xf32>
      %97 = vector.shape_cast %96 : vector<16x4xf32> to vector<2x8x4xf32>
      %98 = vector.extract_strided_slice %86 {offsets = [0, 20], sizes = [16, 4], strides = [1, 1]} : vector<16x48xf32> to vector<16x4xf32>
      %99 = vector.shape_cast %98 : vector<16x4xf32> to vector<2x8x4xf32>
      %100 = vector.extract_strided_slice %86 {offsets = [0, 24], sizes = [16, 4], strides = [1, 1]} : vector<16x48xf32> to vector<16x4xf32>
      %101 = vector.shape_cast %100 : vector<16x4xf32> to vector<2x8x4xf32>
      %102 = vector.extract_strided_slice %86 {offsets = [0, 28], sizes = [16, 4], strides = [1, 1]} : vector<16x48xf32> to vector<16x4xf32>
      %103 = vector.shape_cast %102 : vector<16x4xf32> to vector<2x8x4xf32>
      %104 = tpu.concatenate %97, %99, %101, %103 in 0 : vector<2x8x4xf32>, vector<2x8x4xf32>, vector<2x8x4xf32>, vector<2x8x4xf32> -> vector<8x8x4xf32>
      %105 = vector.extract_strided_slice %86 {offsets = [0, 32], sizes = [16, 4], strides = [1, 1]} : vector<16x48xf32> to vector<16x4xf32>
      %106 = vector.shape_cast %105 : vector<16x4xf32> to vector<2x8x4xf32>
      %107 = vector.extract_strided_slice %86 {offsets = [0, 36], sizes = [16, 4], strides = [1, 1]} : vector<16x48xf32> to vector<16x4xf32>
      %108 = vector.shape_cast %107 : vector<16x4xf32> to vector<2x8x4xf32>
      %109 = vector.extract_strided_slice %86 {offsets = [0, 40], sizes = [16, 4], strides = [1, 1]} : vector<16x48xf32> to vector<16x4xf32>
      %110 = vector.shape_cast %109 : vector<16x4xf32> to vector<2x8x4xf32>
      %111 = vector.extract_strided_slice %86 {offsets = [0, 44], sizes = [16, 4], strides = [1, 1]} : vector<16x48xf32> to vector<16x4xf32>
      %112 = vector.shape_cast %111 : vector<16x4xf32> to vector<2x8x4xf32>
      %113 = tpu.concatenate %106, %108, %110, %112 in 0 : vector<2x8x4xf32>, vector<2x8x4xf32>, vector<2x8x4xf32>, vector<2x8x4xf32> -> vector<8x8x4xf32>
      "tpu.trace_start"() <{level = 10 : i32, message = "nqd,nkd->nqk"}> : () -> ()
      %cst_40 = arith.constant dense<0.000000e+00> : vector<8x8x8xf32>
      %114 = tpu.matmul %95, %104, %cst_40 {dimension_numbers = #tpu.dot_dimension_numbers<[2], [2], [1], [1], [0, 0, 0, 1, 1, 1], [0], [0]>} : vector<8x8x4xf32>, vector<8x8x4xf32>, vector<8x8x8xf32> -> vector<8x8x8xf32>
      "tpu.trace_stop"() : () -> ()
      %cst_41 = arith.constant 5.000000e-01 : f32
      %115 = vector.broadcast %cst_41 : f32 to vector<8x8x8xf32>
      %116 = arith.mulf %114, %115 : vector<8x8x8xf32>
      %cst_42 = arith.constant -3.40282347E+38 : f32
      %117 = vector.shape_cast %16 : vector<1x8x8xi1> to vector<1x8x8xi1>
      %118 = vector.broadcast %117 : vector<1x8x8xi1> to vector<8x8x8xi1>
      %119 = vector.broadcast %cst_42 : f32 to vector<8x8x8xf32>
      %120 = arith.select %118, %116, %119 : vector<8x8x8xi1>, vector<8x8x8xf32>
      %cst_43 = arith.constant dense<0xFF800000> : vector<8x8xf32>
      %121 = vector.multi_reduction <maximumf>, %120, %cst_43 [2] : vector<8x8x8xf32> to vector<8x8xf32>
      %122 = vector.shape_cast %121 : vector<8x8xf32> to vector<8x8x1xf32>
      %123 = vector.broadcast %122 : vector<8x8x1xf32> to vector<8x8x8xf32>
      %124 = arith.subf %120, %123 : vector<8x8x8xf32>
      %125 = math.exp %124 : vector<8x8x8xf32>
      %cst_44 = arith.constant dense<0.000000e+00> : vector<8x8xf32>
      %126 = vector.multi_reduction <add>, %125, %cst_44 [2] : vector<8x8x8xf32> to vector<8x8xf32>
      %127 = vector.shape_cast %126 : vector<8x8xf32> to vector<8x8x1xf32>
      %128 = tpu.reciprocal %127 {approx = true} : vector<8x8x1xf32> -> vector<8x8x1xf32>
      %129 = vector.broadcast %128 : vector<8x8x1xf32> to vector<8x8x8xf32>
      %130 = arith.mulf %125, %129 : vector<8x8x8xf32>
      "tpu.trace_start"() <{level = 10 : i32, message = "nqk,nkd->nqd"}> : () -> ()
      %cst_45 = arith.constant dense<0.000000e+00> : vector<8x8x4xf32>
      %131 = tpu.matmul %130, %113, %cst_45 {dimension_numbers = #tpu.dot_dimension_numbers<[2], [1], [1], [2], [0, 0, 0, 1, 1, 2], [0], [0]>} : vector<8x8x8xf32>, vector<8x8x4xf32>, vector<8x8x4xf32> -> vector<8x8x4xf32>
      "tpu.trace_stop"() : () -> ()
      %132 = vector.extract_strided_slice %131 {offsets = [0, 0, 0], sizes = [2, 8, 4], strides = [1, 1, 1]} : vector<8x8x4xf32> to vector<2x8x4xf32>
      %133 = vector.shape_cast %132 : vector<2x8x4xf32> to vector<16x4xf32>
      %134 = vector.extract_strided_slice %131 {offsets = [2, 0, 0], sizes = [2, 8, 4], strides = [1, 1, 1]} : vector<8x8x4xf32> to vector<2x8x4xf32>
      %135 = vector.shape_cast %134 : vector<2x8x4xf32> to vector<16x4xf32>
      %136 = vector.extract_strided_slice %131 {offsets = [4, 0, 0], sizes = [2, 8, 4], strides = [1, 1, 1]} : vector<8x8x4xf32> to vector<2x8x4xf32>
      %137 = vector.shape_cast %136 : vector<2x8x4xf32> to vector<16x4xf32>
      %138 = vector.extract_strided_slice %131 {offsets = [6, 0, 0], sizes = [2, 8, 4], strides = [1, 1, 1]} : vector<8x8x4xf32> to vector<2x8x4xf32>
      %139 = vector.shape_cast %138 : vector<2x8x4xf32> to vector<16x4xf32>
      %140 = tpu.concatenate %133, %135, %137, %139 in 1 : vector<16x4xf32>, vector<16x4xf32>, vector<16x4xf32>, vector<16x4xf32> -> vector<16x16xf32>
      %141 = arith.index_cast %arg22 : i32 to index
      %c0_46 = arith.constant 0 : index
      %c0_47 = arith.constant 0 : index
      %142 = vector.load %arg9[%141, %c0_46, %c0_47] : memref<8x16x16xf32, #tpu.memory_space<vmem>>, vector<1x16x16xf32>
      %143 = vector.shape_cast %142 : vector<1x16x16xf32> to vector<16x16xf32>
      %cst_48 = arith.constant dense<0.000000e+00> : vector<16x16xf32>
      %144 = tpu.matmul %140, %143, %cst_48 {dimension_numbers = #tpu.dot_dimension_numbers<[1], [0], [0], [1], [0, 0, 1, 1], [], []>} : vector<16x16xf32>, vector<16x16xf32>, vector<16x16xf32> -> vector<16x16xf32>
      %145 = arith.index_cast %arg22 : i32 to index
      %c0_49 = arith.constant 0 : index
      %c0_50 = arith.constant 0 : index
      %146 = vector.load %arg10[%145, %c0_49, %c0_50] : memref<8x1x16xf32, #tpu.memory_space<vmem>>, vector<1x1x16xf32>
      %147 = vector.shape_cast %146 : vector<1x1x16xf32> to vector<1x16xf32>
      %148 = vector.broadcast %147 : vector<1x16xf32> to vector<16x16xf32>
      %149 = arith.addf %144, %148 : vector<16x16xf32>
      %150 = arith.addf %arg23, %149 : vector<16x16xf32>
      %151 = arith.index_cast %arg22 : i32 to index
      %c0_51 = arith.constant 0 : index
      %c0_52 = arith.constant 0 : index
      %152 = vector.load %arg11[%151, %c0_51, %c0_52] : memref<8x1x16xf32, #tpu.memory_space<vmem>>, vector<1x1x16xf32>
      %153 = vector.shape_cast %152 : vector<1x1x16xf32> to vector<1x16xf32>
      %154 = arith.index_cast %arg22 : i32 to index
      %c0_53 = arith.constant 0 : index
      %c0_54 = arith.constant 0 : index
      %155 = vector.load %arg12[%154, %c0_53, %c0_54] : memref<8x1x16xf32, #tpu.memory_space<vmem>>, vector<1x1x16xf32>
      %156 = vector.shape_cast %155 : vector<1x1x16xf32> to vector<1x16xf32>
      %cst_55 = arith.constant dense<0.000000e+00> : vector<16xf32>
      %157 = vector.multi_reduction <add>, %150, %cst_55 [1] : vector<16x16xf32> to vector<16xf32>
      %158 = vector.shape_cast %157 : vector<16xf32> to vector<16x1xf32>
      %cst_56 = arith.constant 1.600000e+01 : f32
      %159 = vector.broadcast %cst_56 : f32 to vector<16x1xf32>
      %160 = arith.divf %158, %159 : vector<16x1xf32>
      %161 = vector.broadcast %160 : vector<16x1xf32> to vector<16x16xf32>
      %162 = arith.subf %150, %161 : vector<16x16xf32>
      %163 = arith.mulf %162, %162 : vector<16x16xf32>
      %cst_57 = arith.constant dense<0.000000e+00> : vector<16xf32>
      %164 = vector.multi_reduction <add>, %163, %cst_57 [1] : vector<16x16xf32> to vector<16xf32>
      %165 = vector.shape_cast %164 : vector<16xf32> to vector<16x1xf32>
      %cst_58 = arith.constant 1.600000e+01 : f32
      %166 = vector.broadcast %cst_58 : f32 to vector<16x1xf32>
      %167 = arith.divf %165, %166 : vector<16x1xf32>
      %168 = vector.broadcast %160 : vector<16x1xf32> to vector<16x16xf32>
      %169 = arith.subf %150, %168 : vector<16x16xf32>
      %cst_59 = arith.constant 9.99999974E-6 : f32
      %170 = vector.broadcast %cst_59 : f32 to vector<16x1xf32>
      %171 = arith.addf %167, %170 : vector<16x1xf32>
      %172 = math.rsqrt %171 : vector<16x1xf32>
      %173 = vector.broadcast %172 : vector<16x1xf32> to vector<16x16xf32>
      %174 = arith.mulf %169, %173 : vector<16x16xf32>
      %175 = vector.broadcast %153 : vector<1x16xf32> to vector<16x16xf32>
      %176 = arith.mulf %174, %175 : vector<16x16xf32>
      %177 = vector.broadcast %156 : vector<1x16xf32> to vector<16x16xf32>
      %178 = arith.addf %176, %177 : vector<16x16xf32>
      %179 = arith.index_cast %arg22 : i32 to index
      %c0_60 = arith.constant 0 : index
      %c0_61 = arith.constant 0 : index
      %180 = vector.load %arg13[%179, %c0_60, %c0_61] : memref<8x16x64xf32, #tpu.memory_space<vmem>>, vector<1x16x64xf32>
      %181 = vector.shape_cast %180 : vector<1x16x64xf32> to vector<16x64xf32>
      %cst_62 = arith.constant dense<0.000000e+00> : vector<16x64xf32>
      %182 = tpu.matmul %178, %181, %cst_62 {dimension_numbers = #tpu.dot_dimension_numbers<[1], [0], [0], [1], [0, 0, 1, 1], [], []>} : vector<16x16xf32>, vector<16x64xf32>, vector<16x64xf32> -> vector<16x64xf32>
      %183 = arith.index_cast %arg22 : i32 to index
      %c0_63 = arith.constant 0 : index
      %c0_64 = arith.constant 0 : index
      %184 = vector.load %arg14[%183, %c0_63, %c0_64] : memref<8x1x64xf32, #tpu.memory_space<vmem>>, vector<1x1x64xf32>
      %185 = vector.shape_cast %184 : vector<1x1x64xf32> to vector<1x64xf32>
      %186 = vector.broadcast %185 : vector<1x64xf32> to vector<16x64xf32>
      %187 = arith.addf %182, %186 : vector<16x64xf32>
      %cst_65 = arith.constant 5.000000e-01 : f32
      %188 = vector.broadcast %cst_65 : f32 to vector<16x64xf32>
      %189 = arith.mulf %188, %187 : vector<16x64xf32>
      %cst_66 = arith.constant 0.636619746 : f32
      %190 = math.sqrt %cst_66 : f32
      %cst_67 = arith.constant 4.471500e-02 : f32
      %191 = vector.broadcast %cst_67 : f32 to vector<16x64xf32>
      %192 = arith.mulf %191, %187 : vector<16x64xf32>
      %193 = arith.mulf %192, %187 : vector<16x64xf32>
      %194 = arith.mulf %193, %187 : vector<16x64xf32>
      %195 = arith.addf %187, %194 : vector<16x64xf32>
      %196 = vector.broadcast %190 : f32 to vector<16x64xf32>
      %197 = arith.mulf %196, %195 : vector<16x64xf32>
      %198 = math.tanh %197 : vector<16x64xf32>
      %cst_68 = arith.constant 1.000000e+00 : f32
      %199 = vector.broadcast %cst_68 : f32 to vector<16x64xf32>
      %200 = arith.addf %199, %198 : vector<16x64xf32>
      %201 = arith.mulf %189, %200 : vector<16x64xf32>
      %202 = arith.index_cast %arg22 : i32 to index
      %c0_69 = arith.constant 0 : index
      %c0_70 = arith.constant 0 : index
      %203 = vector.load %arg15[%202, %c0_69, %c0_70] : memref<8x64x16xf32, #tpu.memory_space<vmem>>, vector<1x64x16xf32>
      %204 = vector.shape_cast %203 : vector<1x64x16xf32> to vector<64x16xf32>
      %cst_71 = arith.constant dense<0.000000e+00> : vector<16x16xf32>
      %205 = tpu.matmul %201, %204, %cst_71 {dimension_numbers = #tpu.dot_dimension_numbers<[1], [0], [0], [1], [0, 0, 1, 1], [], []>} : vector<16x64xf32>, vector<64x16xf32>, vector<16x16xf32> -> vector<16x16xf32>
      %206 = arith.index_cast %arg22 : i32 to index
      %c0_72 = arith.constant 0 : index
      %c0_73 = arith.constant 0 : index
      %207 = vector.load %arg16[%206, %c0_72, %c0_73] : memref<8x1x16xf32, #tpu.memory_space<vmem>>, vector<1x1x16xf32>
      %208 = vector.shape_cast %207 : vector<1x1x16xf32> to vector<1x16xf32>
      %209 = vector.broadcast %208 : vector<1x16xf32> to vector<16x16xf32>
      %210 = arith.addf %205, %209 : vector<16x16xf32>
      %211 = arith.addf %150, %210 : vector<16x16xf32>
      scf.yield %211 : vector<16x16xf32>
    }
    %c8_i32_8 = arith.constant 8 : i32
    %c0_9 = arith.constant 0 : index
    %c0_10 = arith.constant 0 : index
    %19 = vector.load %arg17[%c0_9, %c0_10] : memref<1x16xf32, #tpu.memory_space<vmem>>, vector<1x16xf32>
    %c0_11 = arith.constant 0 : index
    %c0_12 = arith.constant 0 : index
    %20 = vector.load %arg18[%c0_11, %c0_12] : memref<1x16xf32, #tpu.memory_space<vmem>>, vector<1x16xf32>
    %cst_13 = arith.constant dense<0.000000e+00> : vector<16xf32>
    %21 = vector.multi_reduction <add>, %18, %cst_13 [1] : vector<16x16xf32> to vector<16xf32>
    %22 = vector.shape_cast %21 : vector<16xf32> to vector<16x1xf32>
    %cst_14 = arith.constant 1.600000e+01 : f32
    %23 = vector.broadcast %cst_14 : f32 to vector<16x1xf32>
    %24 = arith.divf %22, %23 : vector<16x1xf32>
    %25 = vector.broadcast %24 : vector<16x1xf32> to vector<16x16xf32>
    %26 = arith.subf %18, %25 : vector<16x16xf32>
    %27 = arith.mulf %26, %26 : vector<16x16xf32>
    %cst_15 = arith.constant dense<0.000000e+00> : vector<16xf32>
    %28 = vector.multi_reduction <add>, %27, %cst_15 [1] : vector<16x16xf32> to vector<16xf32>
    %29 = vector.shape_cast %28 : vector<16xf32> to vector<16x1xf32>
    %cst_16 = arith.constant 1.600000e+01 : f32
    %30 = vector.broadcast %cst_16 : f32 to vector<16x1xf32>
    %31 = arith.divf %29, %30 : vector<16x1xf32>
    %32 = vector.broadcast %24 : vector<16x1xf32> to vector<16x16xf32>
    %33 = arith.subf %18, %32 : vector<16x16xf32>
    %cst_17 = arith.constant 9.99999974E-6 : f32
    %34 = vector.broadcast %cst_17 : f32 to vector<16x1xf32>
    %35 = arith.addf %31, %34 : vector<16x1xf32>
    %36 = math.rsqrt %35 : vector<16x1xf32>
    %37 = vector.broadcast %36 : vector<16x1xf32> to vector<16x16xf32>
    %38 = arith.mulf %33, %37 : vector<16x16xf32>
    %39 = vector.broadcast %19 : vector<1x16xf32> to vector<16x16xf32>
    %40 = arith.mulf %38, %39 : vector<16x16xf32>
    %41 = vector.broadcast %20 : vector<1x16xf32> to vector<16x16xf32>
    %42 = arith.addf %40, %41 : vector<16x16xf32>
    %c0_18 = arith.constant 0 : index
    %c0_19 = arith.constant 0 : index
    %43 = vector.load %arg19[%c0_18, %c0_19] : memref<16x128xf32, #tpu.memory_space<vmem>>, vector<16x128xf32>
    %cst_20 = arith.constant dense<0.000000e+00> : vector<16x128xf32>
    %44 = tpu.matmul %42, %43, %cst_20 {dimension_numbers = #tpu.dot_dimension_numbers<[1], [0], [0], [1], [0, 0, 1, 1], [], []>} : vector<16x16xf32>, vector<16x128xf32>, vector<16x128xf32> -> vector<16x128xf32>
    %c0_21 = arith.constant 0 : index
    %c0_22 = arith.constant 0 : index
    %45 = vector.load %arg20[%c0_21, %c0_22] : memref<1x128xf32, #tpu.memory_space<vmem>>, vector<1x128xf32>
    %46 = vector.broadcast %45 : vector<1x128xf32> to vector<16x128xf32>
    %47 = arith.addf %44, %46 : vector<16x128xf32>
    %48 = vector.shape_cast %47 : vector<16x128xf32> to vector<2x8x128xf32>
    %c0_23 = arith.constant 0 : index
    %c0_24 = arith.constant 0 : index
    %c0_25 = arith.constant 0 : index
    %49 = vector.load %arg21[%c0_23, %c0_24, %c0_25] : memref<2x8x128xf32, #tpu.memory_space<vmem>>, vector<2x8x128xf32>
    tpu.vector_store %arg21[%c0_23, %c0_24, %c0_25], %48 {strides = array<i32>} : memref<2x8x128xf32, #tpu.memory_space<vmem>>, vector<2x8x128xf32>,
    return
  }
  func.func @transform_0(%arg0: i32) -> (i32, i32, i32) {
    %c0_i32 = arith.constant 0 : i32
    %c0_i32_0 = arith.constant 0 : i32
    %c0_i32_1 = arith.constant 0 : i32
    return %arg0, %c0_i32, %c0_i32_0 : i32, i32, i32
  }
  func.func @transform_1(%arg0: i32) -> (i32, i32) {
    %c0_i32 = arith.constant 0 : i32
    %c0_i32_0 = arith.constant 0 : i32
    %c0_i32_1 = arith.constant 0 : i32
    return %c0_i32, %c0_i32_0 : i32, i32
  }
  func.func @transform_2(%arg0: i32) -> (i32, i32) {
    %c0_i32 = arith.constant 0 : i32
    %c0_i32_0 = arith.constant 0 : i32
    %c0_i32_1 = arith.constant 0 : i32
    return %c0_i32, %c0_i32_0 : i32, i32
  }
  func.func @transform_3(%arg0: i32) -> (i32, i32) {
    %c0_i32 = arith.constant 0 : i32
    %c0_i32_0 = arith.constant 0 : i32
    %c0_i32_1 = arith.constant 0 : i32
    return %c0_i32, %c0_i32_0 : i32, i32
  }
  func.func @transform_4(%arg0: i32) -> (i32, i32, i32) {
    %c0_i32 = arith.constant 0 : i32
    %c0_i32_0 = arith.constant 0 : i32
    %c0_i32_1 = arith.constant 0 : i32
    %c0_i32_2 = arith.constant 0 : i32
    return %c0_i32, %c0_i32_0, %c0_i32_1 : i32, i32, i32
  }
  func.func @transform_5(%arg0: i32) -> (i32, i32, i32) {
    %c0_i32 = arith.constant 0 : i32
    %c0_i32_0 = arith.constant 0 : i32
    %c0_i32_1 = arith.constant 0 : i32
    %c0_i32_2 = arith.constant 0 : i32
    return %c0_i32, %c0_i32_0, %c0_i32_1 : i32, i32, i32
  }
  func.func @transform_6(%arg0: i32) -> (i32, i32, i32) {
    %c0_i32 = arith.constant 0 : i32
    %c0_i32_0 = arith.constant 0 : i32
    %c0_i32_1 = arith.constant 0 : i32
    %c0_i32_2 = arith.constant 0 : i32
    return %c0_i32, %c0_i32_0, %c0_i32_1 : i32, i32, i32
  }
  func.func @transform_7(%arg0: i32) -> (i32, i32, i32) {
    %c0_i32 = arith.constant 0 : i32
    %c0_i32_0 = arith.constant 0 : i32
    %c0_i32_1 = arith.constant 0 : i32
    %c0_i32_2 = arith.constant 0 : i32
    return %c0_i32, %c0_i32_0, %c0_i32_1 : i32, i32, i32
  }
  func.func @transform_8(%arg0: i32) -> (i32, i32, i32) {
    %c0_i32 = arith.constant 0 : i32
    %c0_i32_0 = arith.constant 0 : i32
    %c0_i32_1 = arith.constant 0 : i32
    %c0_i32_2 = arith.constant 0 : i32
    return %c0_i32, %c0_i32_0, %c0_i32_1 : i32, i32, i32
  }
  func.func @transform_9(%arg0: i32) -> (i32, i32, i32) {
    %c0_i32 = arith.constant 0 : i32
    %c0_i32_0 = arith.constant 0 : i32
    %c0_i32_1 = arith.constant 0 : i32
    %c0_i32_2 = arith.constant 0 : i32
    return %c0_i32, %c0_i32_0, %c0_i32_1 : i32, i32, i32
  }
  func.func @transform_10(%arg0: i32) -> (i32, i32, i32) {
    %c0_i32 = arith.constant 0 : i32
    %c0_i32_0 = arith.constant 0 : i32
    %c0_i32_1 = arith.constant 0 : i32
    %c0_i32_2 = arith.constant 0 : i32
    return %c0_i32, %c0_i32_0, %c0_i32_1 : i32, i32, i32
  }
  func.func @transform_11(%arg0: i32) -> (i32, i32, i32) {
    %c0_i32 = arith.constant 0 : i32
    %c0_i32_0 = arith.constant 0 : i32
    %c0_i32_1 = arith.constant 0 : i32
    %c0_i32_2 = arith.constant 0 : i32
    return %c0_i32, %c0_i32_0, %c0_i32_1 : i32, i32, i32
  }
  func.func @transform_12(%arg0: i32) -> (i32, i32, i32) {
    %c0_i32 = arith.constant 0 : i32
    %c0_i32_0 = arith.constant 0 : i32
    %c0_i32_1 = arith.constant 0 : i32
    %c0_i32_2 = arith.constant 0 : i32
    return %c0_i32, %c0_i32_0, %c0_i32_1 : i32, i32, i32
  }
  func.func @transform_13(%arg0: i32) -> (i32, i32, i32) {
    %c0_i32 = arith.constant 0 : i32
    %c0_i32_0 = arith.constant 0 : i32
    %c0_i32_1 = arith.constant 0 : i32
    %c0_i32_2 = arith.constant 0 : i32
    return %c0_i32, %c0_i32_0, %c0_i32_1 : i32, i32, i32
  }
  func.func @transform_14(%arg0: i32) -> (i32, i32, i32) {
    %c0_i32 = arith.constant 0 : i32
    %c0_i32_0 = arith.constant 0 : i32
    %c0_i32_1 = arith.constant 0 : i32
    %c0_i32_2 = arith.constant 0 : i32
    return %c0_i32, %c0_i32_0, %c0_i32_1 : i32, i32, i32
  }
  func.func @transform_15(%arg0: i32) -> (i32, i32, i32) {
    %c0_i32 = arith.constant 0 : i32
    %c0_i32_0 = arith.constant 0 : i32
    %c0_i32_1 = arith.constant 0 : i32
    %c0_i32_2 = arith.constant 0 : i32
    return %c0_i32, %c0_i32_0, %c0_i32_1 : i32, i32, i32
  }
  func.func @transform_16(%arg0: i32) -> (i32, i32) {
    %c0_i32 = arith.constant 0 : i32
    %c0_i32_0 = arith.constant 0 : i32
    %c0_i32_1 = arith.constant 0 : i32
    return %c0_i32, %c0_i32_0 : i32, i32
  }
  func.func @transform_17(%arg0: i32) -> (i32, i32) {
    %c0_i32 = arith.constant 0 : i32
    %c0_i32_0 = arith.constant 0 : i32
    %c0_i32_1 = arith.constant 0 : i32
    return %c0_i32, %c0_i32_0 : i32, i32
  }
  func.func @transform_18(%arg0: i32) -> (i32, i32) {
    %c0_i32 = arith.constant 0 : i32
    %c0_i32_0 = arith.constant 0 : i32
    %c0_i32_1 = arith.constant 0 : i32
    return %c0_i32, %c0_i32_0 : i32, i32
  }
  func.func @transform_19(%arg0: i32) -> (i32, i32) {
    %c0_i32 = arith.constant 0 : i32
    %c0_i32_0 = arith.constant 0 : i32
    %c0_i32_1 = arith.constant 0 : i32
    return %c0_i32, %c0_i32_0 : i32, i32
  }
  func.func @transform_20(%arg0: i32) -> (i32, i32, i32) {
    %c0_i32 = arith.constant 0 : i32
    %c0_i32_0 = arith.constant 0 : i32
    %c0_i32_1 = arith.constant 0 : i32
    return %arg0, %c0_i32, %c0_i32_0 : i32, i32, i32
  }
}

</mosaic_0001>

<llo_original>
// kernel: tpu_custom_call.1
$region0: #{tpu_custom_call.1}
  #allocation0 [shape = 'u32[]', space=smem, size = 0x4, offset = 0x4, fixed_abs, tag = 'smem constant byte address 0x4 - core index']
  #allocation1 [shape = 'u32[72,128]{1,0:T(1,128)}', space=vmem, size = 0x9000, scoped, tag = 'internal scratch']
  %s0 = inlined_call_operand.vmem [shape: f32[2,8,2], index: 0, kind: input, shape index: {}]
  %s1 = inlined_call_operand.vmem [shape: f32[2,16], index: 1, kind: input, shape index: {}]
  %s2 = inlined_call_operand.vmem [shape: f32[1,16], index: 2, kind: input, shape index: {}]
  %s3 = inlined_call_operand.vmem [shape: f32[8,16], index: 3, kind: input, shape index: {}]
  %s4 = inlined_call_operand.vmem [shape: f32[8,1,16], index: 4, kind: input, shape index: {}]
  %s5 = inlined_call_operand.vmem [shape: f32[8,1,16], index: 5, kind: input, shape index: {}]
  %s6 = inlined_call_operand.vmem [shape: f32[8,16,48], index: 6, kind: input, shape index: {}]
  %s7 = inlined_call_operand.vmem [shape: f32[8,1,48], index: 7, kind: input, shape index: {}]
  %s8 = inlined_call_operand.vmem [shape: f32[8,16,16], index: 8, kind: input, shape index: {}]
  %s9 = inlined_call_operand.vmem [shape: f32[8,1,16], index: 9, kind: input, shape index: {}]
  %s10 = inlined_call_operand.vmem [shape: f32[8,1,16], index: 10, kind: input, shape index: {}]
  %s11 = inlined_call_operand.vmem [shape: f32[8,1,16], index: 11, kind: input, shape index: {}]
  %s12 = inlined_call_operand.vmem [shape: f32[8,16,64], index: 12, kind: input, shape index: {}]
  %s13 = inlined_call_operand.vmem [shape: f32[8,1,64], index: 13, kind: input, shape index: {}]
  %s14 = inlined_call_operand.vmem [shape: f32[8,64,16], index: 14, kind: input, shape index: {}]
  %s15 = inlined_call_operand.vmem [shape: f32[8,1,16], index: 15, kind: input, shape index: {}]
  %s16 = inlined_call_operand.vmem [shape: f32[1,16], index: 16, kind: input, shape index: {}]
  %s17 = inlined_call_operand.vmem [shape: f32[1,16], index: 17, kind: input, shape index: {}]
  %s18 = inlined_call_operand.vmem [shape: f32[16,128], index: 18, kind: input, shape index: {}]
  %s19 = inlined_call_operand.vmem [shape: f32[1,128], index: 19, kind: input, shape index: {}]
  %s20 = inlined_call_operand.hbm [shape: f32[2,8,128], index: 20, kind: output, shape index: {}]
  %s21 = sld [smem:[#allocation0]]
  $region97: #{tpu_custom_call.1} parent=0
    _
  %s23 = ssub.s32 1, %s21
  %s24 = scalar_select 0, %s23, %s21
  $region1: #{tpu_custom_call.1} parent=0
    #allocation2 [shape = 'u8[8192]{0}', space=vmem, size = 0x2000, scoped, tag = 'output window, operand 0, single buffered']
    #allocation3 [shape = 's32[1]{0}', space=sflag, size = 0x4, scoped, tag = 'scoped memory for tpu_custom_call.1']
    %25 = vsyncpa [#allocation3], 0
    // Predicated region
    $region2: #{tpu_custom_call.1} parent=1 // pred_check
      _
    $region3: #{tpu_custom_call.1} parent=1 // pred_check_branch
      %27 = sbr.rel (0) target = $region5
    $region4: #{tpu_custom_call.1} parent=1 // pred_region
      _
    $region5: #{tpu_custom_call.1} parent=1 // pred_fallthru
      _
    // Predicated region
    $region6: #{tpu_custom_call.1} parent=1 // pred_check
      _
    $region7: #{tpu_custom_call.1} parent=1 // pred_check_branch
      %29 = sbr.rel (0) target = $region9
    $region8: #{tpu_custom_call.1} parent=1 // pred_region
      _
    $region9: #{tpu_custom_call.1} parent=1 // pred_fallthru
      _
    // Predicated region
    $region10: #{tpu_custom_call.1} parent=1 // pred_check
      _
    $region11: #{tpu_custom_call.1} parent=1 // pred_check_branch
      %31 = sbr.rel (0) target = $region13
    $region12: #{tpu_custom_call.1} parent=1 // pred_region
      _
    $region13: #{tpu_custom_call.1} parent=1 // pred_fallthru
      _
    // Predicated region
    $region14: #{tpu_custom_call.1} parent=1 // pred_check
      _
    $region15: #{tpu_custom_call.1} parent=1 // pred_check_branch
      %33 = sbr.rel (0) target = $region17
    $region16: #{tpu_custom_call.1} parent=1 // pred_region
      _
    $region17: #{tpu_custom_call.1} parent=1 // pred_fallthru
      _
    // Predicated region
    $region18: #{tpu_custom_call.1} parent=1 // pred_check
      _
    $region19: #{tpu_custom_call.1} parent=1 // pred_check_branch
      %35 = sbr.rel (0) target = $region21
    $region20: #{tpu_custom_call.1} parent=1 // pred_region
      _
    $region21: #{tpu_custom_call.1} parent=1 // pred_fallthru
      _
    // Predicated region
    $region22: #{tpu_custom_call.1} parent=1 // pred_check
      _
    $region23: #{tpu_custom_call.1} parent=1 // pred_check_branch
      %37 = sbr.rel (0) target = $region25
    $region24: #{tpu_custom_call.1} parent=1 // pred_region
      _
    $region25: #{tpu_custom_call.1} parent=1 // pred_fallthru
      _
    // Predicated region
    $region26: #{tpu_custom_call.1} parent=1 // pred_check
      _
    $region27: #{tpu_custom_call.1} parent=1 // pred_check_branch
      %39 = sbr.rel (0) target = $region29
    $region28: #{tpu_custom_call.1} parent=1 // pred_region
      _
    $region29: #{tpu_custom_call.1} parent=1 // pred_fallthru
      _
    // Predicated region
    $region30: #{tpu_custom_call.1} parent=1 // pred_check
      _
    $region31: #{tpu_custom_call.1} parent=1 // pred_check_branch
      %41 = sbr.rel (0) target = $region33
    $region32: #{tpu_custom_call.1} parent=1 // pred_region
      _
    $region33: #{tpu_custom_call.1} parent=1 // pred_fallthru
      _
    // Predicated region
    $region34: #{tpu_custom_call.1} parent=1 // pred_check
      _
    $region35: #{tpu_custom_call.1} parent=1 // pred_check_branch
      %43 = sbr.rel (0) target = $region37
    $region36: #{tpu_custom_call.1} parent=1 // pred_region
      _
    $region37: #{tpu_custom_call.1} parent=1 // pred_fallthru
      _
    // Predicated region
    $region38: #{tpu_custom_call.1} parent=1 // pred_check
      _
    $region39: #{tpu_custom_call.1} parent=1 // pred_check_branch
      %45 = sbr.rel (0) target = $region41
    $region40: #{tpu_custom_call.1} parent=1 // pred_region
      _
    $region41: #{tpu_custom_call.1} parent=1 // pred_fallthru
      _
    // Predicated region
    $region42: #{tpu_custom_call.1} parent=1 // pred_check
      _
    $region43: #{tpu_custom_call.1} parent=1 // pred_check_branch
      %47 = sbr.rel (0) target = $region45
    $region44: #{tpu_custom_call.1} parent=1 // pred_region
      _
    $region45: #{tpu_custom_call.1} parent=1 // pred_fallthru
      _
    // Predicated region
    $region46: #{tpu_custom_call.1} parent=1 // pred_check
      _
    $region47: #{tpu_custom_call.1} parent=1 // pred_check_branch
      %49 = sbr.rel (0) target = $region49
    $region48: #{tpu_custom_call.1} parent=1 // pred_region
      _
    $region49: #{tpu_custom_call.1} parent=1 // pred_fallthru
      _
    // Predicated region
    $region50: #{tpu_custom_call.1} parent=1 // pred_check
      _
    $region51: #{tpu_custom_call.1} parent=1 // pred_check_branch
      %51 = sbr.rel (0) target = $region53
    $region52: #{tpu_custom_call.1} parent=1 // pred_region
      _
    $region53: #{tpu_custom_call.1} parent=1 // pred_fallthru
      _
    // Predicated region
    $region54: #{tpu_custom_call.1} parent=1 // pred_check
      _
    $region55: #{tpu_custom_call.1} parent=1 // pred_check_branch
      %53 = sbr.rel (0) target = $region57
    $region56: #{tpu_custom_call.1} parent=1 // pred_region
      _
    $region57: #{tpu_custom_call.1} parent=1 // pred_fallthru
      _
    // Predicated region
    $region58: #{tpu_custom_call.1} parent=1 // pred_check
      _
    $region59: #{tpu_custom_call.1} parent=1 // pred_check_branch
      %55 = sbr.rel (0) target = $region61
    $region60: #{tpu_custom_call.1} parent=1 // pred_region
      _
    $region61: #{tpu_custom_call.1} parent=1 // pred_fallthru
      _
    // Predicated region
    $region62: #{tpu_custom_call.1} parent=1 // pred_check
      _
    $region63: #{tpu_custom_call.1} parent=1 // pred_check_branch
      %57 = sbr.rel (0) target = $region65
    $region64: #{tpu_custom_call.1} parent=1 // pred_region
      _
    $region65: #{tpu_custom_call.1} parent=1 // pred_fallthru
      _
    // Predicated region
    $region66: #{tpu_custom_call.1} parent=1 // pred_check
      _
    $region67: #{tpu_custom_call.1} parent=1 // pred_check_branch
      %59 = sbr.rel (0) target = $region69
    $region68: #{tpu_custom_call.1} parent=1 // pred_region
      _
    $region69: #{tpu_custom_call.1} parent=1 // pred_fallthru
      _
    // Predicated region
    $region70: #{tpu_custom_call.1} parent=1 // pred_check
      _
    $region71: #{tpu_custom_call.1} parent=1 // pred_check_branch
      %61 = sbr.rel (0) target = $region73
    $region72: #{tpu_custom_call.1} parent=1 // pred_region
      _
    $region73: #{tpu_custom_call.1} parent=1 // pred_fallthru
      _
    // Predicated region
    $region74: #{tpu_custom_call.1} parent=1 // pred_check
      _
    $region75: #{tpu_custom_call.1} parent=1 // pred_check_branch
      %63 = sbr.rel (0) target = $region77
    $region76: #{tpu_custom_call.1} parent=1 // pred_region
      _
    $region77: #{tpu_custom_call.1} parent=1 // pred_fallthru
      _
    // Predicated region
    $region78: #{tpu_custom_call.1} parent=1 // pred_check
      _
    $region79: #{tpu_custom_call.1} parent=1 // pred_check_branch
      %65 = sbr.rel (0) target = $region81
    $region80: #{tpu_custom_call.1} parent=1 // pred_region
      _
    $region81: #{tpu_custom_call.1} parent=1 // pred_fallthru
      _
    %v66 = vld [vmem:[%s0] sm:$0xff]
    %v67 = vld [vmem:[%s0 + $0x8] sm:$0xff]
    %v68 = vld [vmem:[%s1] sm:$0x3]
    %v69 = vld [vmem:[%s2] sm:$0x1]
    %v71 = vperm.slane %v69, 0
    %vm73 = vcmask 15360
    %v75 = vsel %vm73, %v66, 0
    %v78 = vsel %vm73, %v67, 0
    %vm80 = vcmask 1041408
    %v82 = vsel %vm80, %v68, 0
    %84 = vmatpush.msra.mxu0 0.0
    %85 = vmatpush.msra.mxu0 0.0
    %86 = vmatpush.msra.mxu0 0.0
    %87 = vmatpush.msra.mxu0 0.0
    %88 = vmatpush.msra.mxu0 0.0
    %89 = vmatpush.msra.mxu0 0.0
    %90 = vmatpush.msra.mxu0 0.0
    %91 = vmatpush.msra.mxu0 0.0
    %92 = vmatpush.msra.mxu0 0.0
    %93 = vmatpush.msra.mxu0 0.0
    %94 = vmatpush.msra.mxu0 0.0
    %95 = vmatpush.msra.mxu0 0.0
    %96 = vmatpush.msra.mxu0 0.0
    %97 = vmatpush.msra.mxu0 0.0
    %98 = vmatpush.msra.mxu0 0.0
    %99 = vmatpush.msra.mxu0 %v82
    %100 = vmatmul.f32.gmra.mxu0 %v75
    %v101 = vpop.f32.mrf.mxu0
    %v102 = vadd.f32 %v71, %v101
    %103 = vmatmul.f32.gmra.mxu0 %v78
    %v104 = vpop.f32.mrf.mxu0
    %v105 = vadd.f32 %v71, %v104
    %106 = vdwg.mxu0
    %v107 = vld [vmem:[%s3] sm:$0xff]
    %v108 = vadd.f32 %v102, %v107
    %v109 = vadd.f32 %v105, %v107
    %v110 = vlaneseq
    %v111 = vshrl.u32 %v110, 7
    %v112 = vlaneseq
    %v113 = vand.u32 %v112, 127
    %vm114 = vcmp.le.s32.totalorder %v113, %v111
    loop: start=0, step=1, limit=8
    $region82: #{tpu_custom_call.1} parent=1 // loop_pre_header
      _
    $region83: #{tpu_custom_call.1} parent=1 // loop_header
      %s116 = sphi 0, %s120
      %p117 = scmp.ge.s32.totalorder %s116, 8
      %v121 = vphi %v108, %v993
      %v122 = vphi %v109, %v994
    $region84: #{tpu_custom_call.1} parent=1 // loop_header_branch
      %119 = sbr.rel (%p117) target = $region88
    $region85: #{tpu_custom_call.1} parent=1 // loop_body
      %s123 = scalar_lea.vmem %s4, %s116
      %v124 = vld [vmem:[%s123] sm:$0x1]
      %s125 = scalar_lea.vmem %s5, %s116
      %v126 = vld [vmem:[%s125] sm:$0x1]
      %vm127 = vcmask 130048
      %v128 = vsel %vm127, %v121, 0.0
      %129 = vadd.xlane.f32.xlu0 %v128
      %v130 = vpop.xlane.xlu0 %129
      %v131 = vsel %vm127, %v122, 0.0
      %132 = vadd.xlane.f32.xlu0 %v131
      %v133 = vpop.xlane.xlu0 %132
      %v134 = vrcp.pop 16.0
      %v135 = vmul.f32 16.0, %v134
      %v136 = vsub.f32 1.0, %v135
      %v137 = vmul.f32 %v134, %v136
      %v138 = vadd.f32 %v134, %v137
      %vm139 = vweird.f32 %v134
      %v140 = vsel %vm139, %v134, %v138
      %v141 = vmul.f32 %v130, %v140
      %v142 = vmul.f32 %v133, %v140
      %v143 = vsub.f32 %v121, %v141
      %v144 = vsub.f32 %v122, %v142
      %v145 = vmul.f32 %v143, %v143
      %v146 = vmul.f32 %v144, %v144
      %v147 = vsel %vm127, %v145, 0.0
      %148 = vadd.xlane.f32.xlu0 %v147
      %v149 = vpop.xlane.xlu0 %148
      %v150 = vsel %vm127, %v146, 0.0
      %151 = vadd.xlane.f32.xlu0 %v150
      %v152 = vpop.xlane.xlu0 %151
      %v153 = vmul.f32 %v149, %v140
      %v154 = vmul.f32 %v152, %v140
      %v155 = vadd.f32 %v153, 1e-05
      %v156 = vadd.f32 %v154, 1e-05
      %v157 = vrsqrt.pop %v155
      %v158 = vmul.f32 %v157, %v155
      %v159 = vmul.f32 %v158, %v157
      %v160 = vmul.f32 0.5, %v159
      %v161 = vsub.f32 1.5, %v160
      %v162 = vmul.f32 %v157, %v161
      %vm163 = vweird.f32 %v155
      %vm164 = vweird.f32 %v157
      %vm165 = vmor %vm163, %vm164
      %v166 = vsel %vm165, %v157, %v162
      %v167 = vrsqrt.pop %v156
      %v168 = vmul.f32 %v167, %v156
      %v169 = vmul.f32 %v168, %v167
      %v170 = vmul.f32 0.5, %v169
      %v171 = vsub.f32 1.5, %v170
      %v172 = vmul.f32 %v167, %v171
      %vm173 = vweird.f32 %v156
      %vm174 = vweird.f32 %v167
      %vm175 = vmor %vm173, %vm174
      %v176 = vsel %vm175, %v167, %v172
      %v177 = vmul.f32 %v143, %v166
      %v178 = vmul.f32 %v144, %v176
      %v180 = vperm.slane %v124, 0
      %v182 = vmul.f32 %v177, %v180
      %v183 = vmul.f32 %v178, %v180
      %v185 = vperm.slane %v126, 0
      %v187 = vadd.f32 %v182, %v185
      %v188 = vadd.f32 %v183, %v185
      %s189 = smul.u32 %s116, 16
      %s190 = scalar_lea.vmem %s6, %s189
      %v191 = vld [vmem:[%s190] sm:$0xff]
      %v192 = vld [vmem:[%s190 + $0x8] sm:$0xff]
      %s193 = scalar_lea.vmem %s7, %s116
      %v194 = vld [vmem:[%s193] sm:$0x1]
      %v196 = vperm.slane %v194, 0
      %v199 = vsel %vm127, %v187, 0
      %v202 = vsel %vm127, %v188, 0
      %204 = vmatpush.msra.mxu0 0.0
      %205 = vmatpush.msra.mxu0 0.0
      %206 = vmatpush.msra.mxu0 0.0
      %207 = vmatpush.msra.mxu0 0.0
      %208 = vmatpush.msra.mxu0 0.0
      %209 = vmatpush.msra.mxu0 0.0
      %210 = vmatpush.msra.mxu0 0.0
      %211 = vmatpush.msra.mxu0 0.0
      %212 = vmatpush.msra.mxu0 0.0
      %213 = vmatpush.msra.mxu0 0.0
      %214 = vmatpush.msra.mxu0 0.0
      %215 = vmatpush.msra.mxu0 0.0
      %216 = vmatpush.msra.mxu0 0.0
      %217 = vmatpush.msra.mxu0 0.0
      %218 = vmatpush.msra.mxu0 %v192
      %219 = vmatpush.msra.mxu0 %v191
      %220 = vmatmul.f32.gmra.mxu0 %v199
      %v221 = vpop.f32.mrf.mxu0
      %v222 = vadd.f32 %v196, %v221
      %223 = vmatmul.f32.gmra.mxu0 %v202
      %v224 = vpop.f32.mrf.mxu0
      %v225 = vadd.f32 %v196, %v224
      %226 = vdwg.mxu0
      %229 = vrot.lane.b32.xlu0 %v222, 124
      %v230 = vpop.permute.xlu0 %229
      %231 = vrot.lane.b32.xlu0 %v225, 124
      %v232 = vpop.permute.xlu0 %231
      %233 = vrot.lane.b32.xlu0 %v222, 120
      %v234 = vpop.permute.xlu0 %233
      %235 = vrot.lane.b32.xlu0 %v225, 120
      %v236 = vpop.permute.xlu0 %235
      %237 = vrot.lane.b32.xlu0 %v222, 116
      %v238 = vpop.permute.xlu0 %237
      %239 = vrot.lane.b32.xlu0 %v225, 116
      %v240 = vpop.permute.xlu0 %239
      %241 = vrot.lane.b32.xlu0 %v222, 112
      %v242 = vpop.permute.xlu0 %241
      %vm243 = vcmask 31744
      %v244 = vsel %vm243, %v222, 0
      %v246 = vsel %vm243, %v242, 0
      %248 = vmatpush.xpose.msra.mxu0 0.0
      %249 = vmatpush.xpose.msra.mxu0 0.0
      %250 = vmatpush.xpose.msra.mxu0 0.0
      %251 = vmatpush.xpose.msra.mxu0 0.0
      %252 = vmatpush.xpose.msra.mxu0 0.0
      %253 = vmatpush.xpose.msra.mxu0 0.0
      %254 = vmatpush.xpose.msra.mxu0 0.0
      %255 = vmatpush.xpose.msra.mxu0 0.0
      %256 = vmatpush.xpose.msra.mxu0 0.0
      %257 = vmatpush.xpose.msra.mxu0 0.0
      %258 = vmatpush.xpose.msra.mxu0 0.0
      %259 = vmatpush.xpose.msra.mxu0 0.0
      %260 = vmatpush.xpose.msra.mxu0 0.0
      %261 = vmatpush.xpose.msra.mxu0 0.0
      %262 = vmatpush.xpose.msra.mxu0 0.0
      %263 = vmatpush.xpose.msra.mxu0 %v246
      %264 = vmatmul.f32.gmra.mxu0 %v244
      %v265 = vpop.f32.mrf.mxu0
      %v266 = vadd.f32 0.0, %v265
      %267 = vdwg.mxu0
      %268 = vrot.lane.b32.xlu0 %v225, 112
      %v269 = vpop.permute.xlu0 %268
      %v270 = vsel %vm243, %v225, 0
      %v272 = vsel %vm243, %v269, 0
      %274 = vmatpush.xpose.msra.mxu0 0.0
      %275 = vmatpush.xpose.msra.mxu0 0.0
      %276 = vmatpush.xpose.msra.mxu0 0.0
      %277 = vmatpush.xpose.msra.mxu0 0.0
      %278 = vmatpush.xpose.msra.mxu0 0.0
      %279 = vmatpush.xpose.msra.mxu0 0.0
      %280 = vmatpush.xpose.msra.mxu0 0.0
      %281 = vmatpush.xpose.msra.mxu0 0.0
      %282 = vmatpush.xpose.msra.mxu0 0.0
      %283 = vmatpush.xpose.msra.mxu0 0.0
      %284 = vmatpush.xpose.msra.mxu0 0.0
      %285 = vmatpush.xpose.msra.mxu0 0.0
      %286 = vmatpush.xpose.msra.mxu0 0.0
      %287 = vmatpush.xpose.msra.mxu0 0.0
      %288 = vmatpush.xpose.msra.mxu0 0.0
      %289 = vmatpush.xpose.msra.mxu0 %v272
      %290 = vmatmul.f32.gmra.mxu0 %v270
      %v291 = vpop.f32.mrf.mxu0
      %v292 = vadd.f32 0.0, %v291
      %293 = vdwg.mxu0
      %294 = vrot.lane.b32.xlu0 %v230, 112
      %v295 = vpop.permute.xlu0 %294
      %v296 = vsel %vm243, %v230, 0
      %v298 = vsel %vm243, %v295, 0
      %300 = vmatpush.xpose.msra.mxu0 0.0
      %301 = vmatpush.xpose.msra.mxu0 0.0
      %302 = vmatpush.xpose.msra.mxu0 0.0
      %303 = vmatpush.xpose.msra.mxu0 0.0
      %304 = vmatpush.xpose.msra.mxu0 0.0
      %305 = vmatpush.xpose.msra.mxu0 0.0
      %306 = vmatpush.xpose.msra.mxu0 0.0
      %307 = vmatpush.xpose.msra.mxu0 0.0
      %308 = vmatpush.xpose.msra.mxu0 0.0
      %309 = vmatpush.xpose.msra.mxu0 0.0
      %310 = vmatpush.xpose.msra.mxu0 0.0
      %311 = vmatpush.xpose.msra.mxu0 0.0
      %312 = vmatpush.xpose.msra.mxu0 0.0
      %313 = vmatpush.xpose.msra.mxu0 0.0
      %314 = vmatpush.xpose.msra.mxu0 0.0
      %315 = vmatpush.xpose.msra.mxu0 %v298
      %316 = vmatmul.f32.gmra.mxu0 %v296
      %v317 = vpop.f32.mrf.mxu0
      %v318 = vadd.f32 0.0, %v317
      %319 = vdwg.mxu0
      %320 = vrot.lane.b32.xlu0 %v232, 112
      %v321 = vpop.permute.xlu0 %320
      %v322 = vsel %vm243, %v232, 0
      %v324 = vsel %vm243, %v321, 0
      %326 = vmatpush.xpose.msra.mxu0 0.0
      %327 = vmatpush.xpose.msra.mxu0 0.0
      %328 = vmatpush.xpose.msra.mxu0 0.0
      %329 = vmatpush.xpose.msra.mxu0 0.0
      %330 = vmatpush.xpose.msra.mxu0 0.0
      %331 = vmatpush.xpose.msra.mxu0 0.0
      %332 = vmatpush.xpose.msra.mxu0 0.0
      %333 = vmatpush.xpose.msra.mxu0 0.0
      %334 = vmatpush.xpose.msra.mxu0 0.0
      %335 = vmatpush.xpose.msra.mxu0 0.0
      %336 = vmatpush.xpose.msra.mxu0 0.0
      %337 = vmatpush.xpose.msra.mxu0 0.0
      %338 = vmatpush.xpose.msra.mxu0 0.0
      %339 = vmatpush.xpose.msra.mxu0 0.0
      %340 = vmatpush.xpose.msra.mxu0 0.0
      %341 = vmatpush.xpose.msra.mxu0 %v324
      %342 = vmatmul.f32.gmra.mxu0 %v322
      %v343 = vpop.f32.mrf.mxu0
      %v344 = vadd.f32 0.0, %v343
      %345 = vdwg.mxu0
      %346 = vrot.lane.b32.xlu0 %v234, 112
      %v347 = vpop.permute.xlu0 %346
      %v348 = vsel %vm243, %v234, 0
      %v350 = vsel %vm243, %v347, 0
      %352 = vmatpush.xpose.msra.mxu0 0.0
      %353 = vmatpush.xpose.msra.mxu0 0.0
      %354 = vmatpush.xpose.msra.mxu0 0.0
      %355 = vmatpush.xpose.msra.mxu0 0.0
      %356 = vmatpush.xpose.msra.mxu0 0.0
      %357 = vmatpush.xpose.msra.mxu0 0.0
      %358 = vmatpush.xpose.msra.mxu0 0.0
      %359 = vmatpush.xpose.msra.mxu0 0.0
      %360 = vmatpush.xpose.msra.mxu0 0.0
      %361 = vmatpush.xpose.msra.mxu0 0.0
      %362 = vmatpush.xpose.msra.mxu0 0.0
      %363 = vmatpush.xpose.msra.mxu0 0.0
      %364 = vmatpush.xpose.msra.mxu0 0.0
      %365 = vmatpush.xpose.msra.mxu0 0.0
      %366 = vmatpush.xpose.msra.mxu0 0.0
      %367 = vmatpush.xpose.msra.mxu0 %v350
      %368 = vmatmul.f32.gmra.mxu0 %v348
      %v369 = vpop.f32.mrf.mxu0
      %v370 = vadd.f32 0.0, %v369
      %371 = vdwg.mxu0
      %372 = vrot.lane.b32.xlu0 %v236, 112
      %v373 = vpop.permute.xlu0 %372
      %v374 = vsel %vm243, %v236, 0
      %v376 = vsel %vm243, %v373, 0
      %378 = vmatpush.xpose.msra.mxu0 0.0
      %379 = vmatpush.xpose.msra.mxu0 0.0
      %380 = vmatpush.xpose.msra.mxu0 0.0
      %381 = vmatpush.xpose.msra.mxu0 0.0
      %382 = vmatpush.xpose.msra.mxu0 0.0
      %383 = vmatpush.xpose.msra.mxu0 0.0
      %384 = vmatpush.xpose.msra.mxu0 0.0
      %385 = vmatpush.xpose.msra.mxu0 0.0
      %386 = vmatpush.xpose.msra.mxu0 0.0
      %387 = vmatpush.xpose.msra.mxu0 0.0
      %388 = vmatpush.xpose.msra.mxu0 0.0
      %389 = vmatpush.xpose.msra.mxu0 0.0
      %390 = vmatpush.xpose.msra.mxu0 0.0
      %391 = vmatpush.xpose.msra.mxu0 0.0
      %392 = vmatpush.xpose.msra.mxu0 0.0
      %393 = vmatpush.xpose.msra.mxu0 %v376
      %394 = vmatmul.f32.gmra.mxu0 %v374
      %v395 = vpop.f32.mrf.mxu0
      %v396 = vadd.f32 0.0, %v395
      %397 = vdwg.mxu0
      %398 = vrot.lane.b32.xlu0 %v238, 112
      %v399 = vpop.permute.xlu0 %398
      %v400 = vsel %vm243, %v238, 0
      %v402 = vsel %vm243, %v399, 0
      %404 = vmatpush.xpose.msra.mxu0 0.0
      %405 = vmatpush.xpose.msra.mxu0 0.0
      %406 = vmatpush.xpose.msra.mxu0 0.0
      %407 = vmatpush.xpose.msra.mxu0 0.0
      %408 = vmatpush.xpose.msra.mxu0 0.0
      %409 = vmatpush.xpose.msra.mxu0 0.0
      %410 = vmatpush.xpose.msra.mxu0 0.0
      %411 = vmatpush.xpose.msra.mxu0 0.0
      %412 = vmatpush.xpose.msra.mxu0 0.0
      %413 = vmatpush.xpose.msra.mxu0 0.0
      %414 = vmatpush.xpose.msra.mxu0 0.0
      %415 = vmatpush.xpose.msra.mxu0 0.0
      %416 = vmatpush.xpose.msra.mxu0 0.0
      %417 = vmatpush.xpose.msra.mxu0 0.0
      %418 = vmatpush.xpose.msra.mxu0 0.0
      %419 = vmatpush.xpose.msra.mxu0 %v402
      %420 = vmatmul.f32.gmra.mxu0 %v400
      %v421 = vpop.f32.mrf.mxu0
      %v422 = vadd.f32 0.0, %v421
      %423 = vdwg.mxu0
      %424 = vrot.lane.b32.xlu0 %v240, 112
      %v425 = vpop.permute.xlu0 %424
      %v426 = vsel %vm243, %v240, 0
      %v428 = vsel %vm243, %v425, 0
      %430 = vmatpush.xpose.msra.mxu0 0.0
      %431 = vmatpush.xpose.msra.mxu0 0.0
      %432 = vmatpush.xpose.msra.mxu0 0.0
      %433 = vmatpush.xpose.msra.mxu0 0.0
      %434 = vmatpush.xpose.msra.mxu0 0.0
      %435 = vmatpush.xpose.msra.mxu0 0.0
      %436 = vmatpush.xpose.msra.mxu0 0.0
      %437 = vmatpush.xpose.msra.mxu0 0.0
      %438 = vmatpush.xpose.msra.mxu0 0.0
      %439 = vmatpush.xpose.msra.mxu0 0.0
      %440 = vmatpush.xpose.msra.mxu0 0.0
      %441 = vmatpush.xpose.msra.mxu0 0.0
      %442 = vmatpush.xpose.msra.mxu0 0.0
      %443 = vmatpush.xpose.msra.mxu0 0.0
      %444 = vmatpush.xpose.msra.mxu0 0.0
      %445 = vmatpush.xpose.msra.mxu0 %v428
      %446 = vmatmul.f32.gmra.mxu0 %v426
      %v447 = vpop.f32.mrf.mxu0
      %v448 = vadd.f32 0.0, %v447
      %449 = vdwg.mxu0
      %v450 = vmul.f32 %v266, 0.5
      %v451 = vmul.f32 %v292, 0.5
      %v452 = vmul.f32 %v318, 0.5
      %v453 = vmul.f32 %v344, 0.5
      %v454 = vmul.f32 %v370, 0.5
      %v455 = vmul.f32 %v396, 0.5
      %v456 = vmul.f32 %v422, 0.5
      %v457 = vmul.f32 %v448, 0.5
      %v458 = vsel %vm114, 1, 0
      %vm459 = vcmp.eq.s32.totalorder %v458, 1
      %v460 = vsel %vm459, %v450, -3.4028235e+38
      %v461 = vsel %vm459, %v451, -3.4028235e+38
      %v462 = vsel %vm459, %v452, -3.4028235e+38
      %v463 = vsel %vm459, %v453, -3.4028235e+38
      %v464 = vsel %vm459, %v454, -3.4028235e+38
      %v465 = vsel %vm459, %v455, -3.4028235e+38
      %v466 = vsel %vm459, %v456, -3.4028235e+38
      %v467 = vsel %vm459, %v457, -3.4028235e+38
      %vm468 = vcmask 64512
      %v469 = vsel %vm468, %v460, -inf
      %470 = vmax.xlane.f32.xlu0 %v469
      %v471 = vpop.xlane.xlu0 %470
      %v472 = vsel %vm468, %v461, -inf
      %473 = vmax.xlane.f32.xlu0 %v472
      %v474 = vpop.xlane.xlu0 %473
      %v475 = vsel %vm468, %v462, -inf
      %476 = vmax.xlane.f32.xlu0 %v475
      %v477 = vpop.xlane.xlu0 %476
      %v478 = vsel %vm468, %v463, -inf
      %479 = vmax.xlane.f32.xlu0 %v478
      %v480 = vpop.xlane.xlu0 %479
      %v481 = vsel %vm468, %v464, -inf
      %482 = vmax.xlane.f32.xlu0 %v481
      %v483 = vpop.xlane.xlu0 %482
      %v484 = vsel %vm468, %v465, -inf
      %485 = vmax.xlane.f32.xlu0 %v484
      %v486 = vpop.xlane.xlu0 %485
      %v487 = vsel %vm468, %v466, -inf
      %488 = vmax.xlane.f32.xlu0 %v487
      %v489 = vpop.xlane.xlu0 %488
      %v490 = vsel %vm468, %v467, -inf
      %491 = vmax.xlane.f32.xlu0 %v490
      %v492 = vpop.xlane.xlu0 %491
      %v493 = vsub.f32 %v460, %v471
      %v494 = vsub.f32 %v461, %v474
      %v495 = vsub.f32 %v462, %v477
      %v496 = vsub.f32 %v463, %v480
      %v497 = vsub.f32 %v464, %v483
      %v498 = vsub.f32 %v465, %v486
      %v499 = vsub.f32 %v466, %v489
      %v500 = vsub.f32 %v467, %v492
      %v501 = vmul.f32 %v493, 1.442695
      %v502 = vpow.pop %v501
      %v503 = vmul.f32 %v494, 1.442695
      %v504 = vpow.pop %v503
      %v505 = vmul.f32 %v495, 1.442695
      %v506 = vpow.pop %v505
      %v507 = vmul.f32 %v496, 1.442695
      %v508 = vpow.pop %v507
      %v509 = vmul.f32 %v497, 1.442695
      %v510 = vpow.pop %v509
      %v511 = vmul.f32 %v498, 1.442695
      %v512 = vpow.pop %v511
      %v513 = vmul.f32 %v499, 1.442695
      %v514 = vpow.pop %v513
      %v515 = vmul.f32 %v500, 1.442695
      %v516 = vpow.pop %v515
      %v517 = vsel %vm468, %v502, 0.0
      %518 = vadd.xlane.f32.xlu0 %v517
      %v519 = vpop.xlane.xlu0 %518
      %v520 = vsel %vm468, %v504, 0.0
      %521 = vadd.xlane.f32.xlu0 %v520
      %v522 = vpop.xlane.xlu0 %521
      %v523 = vsel %vm468, %v506, 0.0
      %524 = vadd.xlane.f32.xlu0 %v523
      %v525 = vpop.xlane.xlu0 %524
      %v526 = vsel %vm468, %v508, 0.0
      %527 = vadd.xlane.f32.xlu0 %v526
      %v528 = vpop.xlane.xlu0 %527
      %v529 = vsel %vm468, %v510, 0.0
      %530 = vadd.xlane.f32.xlu0 %v529
      %v531 = vpop.xlane.xlu0 %530
      %v532 = vsel %vm468, %v512, 0.0
      %533 = vadd.xlane.f32.xlu0 %v532
      %v534 = vpop.xlane.xlu0 %533
      %v535 = vsel %vm468, %v514, 0.0
      %536 = vadd.xlane.f32.xlu0 %v535
      %v537 = vpop.xlane.xlu0 %536
      %v538 = vsel %vm468, %v516, 0.0
      %539 = vadd.xlane.f32.xlu0 %v538
      %v540 = vpop.xlane.xlu0 %539
      %v541 = vrcp.pop %v519
      %v542 = vrcp.pop %v522
      %v543 = vrcp.pop %v525
      %v544 = vrcp.pop %v528
      %v545 = vrcp.pop %v531
      %v546 = vrcp.pop %v534
      %v547 = vrcp.pop %v537
      %v548 = vrcp.pop %v540
      %v549 = vmul.f32 %v502, %v541
      %v550 = vmul.f32 %v504, %v542
      %v551 = vmul.f32 %v506, %v543
      %v552 = vmul.f32 %v508, %v544
      %v553 = vmul.f32 %v510, %v545
      %v554 = vmul.f32 %v512, %v546
      %v555 = vmul.f32 %v514, %v547
      %v556 = vmul.f32 %v516, %v548
      %557 = vrot.lane.b32.xlu0 %v222, 96
      %v558 = vpop.permute.xlu0 %557
      %v561 = vsel %vm468, %v549, 0
      %563 = vmatpush.msra.mxu0 0.0
      %564 = vmatpush.msra.mxu0 0.0
      %565 = vmatpush.msra.mxu0 0.0
      %566 = vmatpush.msra.mxu0 0.0
      %567 = vmatpush.msra.mxu0 0.0
      %568 = vmatpush.msra.mxu0 0.0
      %569 = vmatpush.msra.mxu0 0.0
      %570 = vmatpush.msra.mxu0 0.0
      %571 = vmatpush.msra.mxu0 0.0
      %572 = vmatpush.msra.mxu0 0.0
      %573 = vmatpush.msra.mxu0 0.0
      %574 = vmatpush.msra.mxu0 0.0
      %575 = vmatpush.msra.mxu0 0.0
      %576 = vmatpush.msra.mxu0 0.0
      %577 = vmatpush.msra.mxu0 0.0
      %578 = vmatpush.msra.mxu0 %v558
      %579 = vmatmul.f32.gmra.mxu0 %v561
      %v580 = vpop.f32.mrf.mxu0
      %v581 = vadd.f32 0.0, %v580
      %582 = vdwg.mxu0
      %583 = vrot.lane.b32.xlu0 %v225, 96
      %v584 = vpop.permute.xlu0 %583
      %v587 = vsel %vm468, %v550, 0
      %589 = vmatpush.msra.mxu0 0.0
      %590 = vmatpush.msra.mxu0 0.0
      %591 = vmatpush.msra.mxu0 0.0
      %592 = vmatpush.msra.mxu0 0.0
      %593 = vmatpush.msra.mxu0 0.0
      %594 = vmatpush.msra.mxu0 0.0
      %595 = vmatpush.msra.mxu0 0.0
      %596 = vmatpush.msra.mxu0 0.0
      %597 = vmatpush.msra.mxu0 0.0
      %598 = vmatpush.msra.mxu0 0.0
      %599 = vmatpush.msra.mxu0 0.0
      %600 = vmatpush.msra.mxu0 0.0
      %601 = vmatpush.msra.mxu0 0.0
      %602 = vmatpush.msra.mxu0 0.0
      %603 = vmatpush.msra.mxu0 0.0
      %604 = vmatpush.msra.mxu0 %v584
      %605 = vmatmul.f32.gmra.mxu0 %v587
      %v606 = vpop.f32.mrf.mxu0
      %v607 = vadd.f32 0.0, %v606
      %608 = vdwg.mxu0
      %609 = vrot.lane.b32.xlu0 %v230, 96
      %v610 = vpop.permute.xlu0 %609
      %v613 = vsel %vm468, %v551, 0
      %615 = vmatpush.msra.mxu0 0.0
      %616 = vmatpush.msra.mxu0 0.0
      %617 = vmatpush.msra.mxu0 0.0
      %618 = vmatpush.msra.mxu0 0.0
      %619 = vmatpush.msra.mxu0 0.0
      %620 = vmatpush.msra.mxu0 0.0
      %621 = vmatpush.msra.mxu0 0.0
      %622 = vmatpush.msra.mxu0 0.0
      %623 = vmatpush.msra.mxu0 0.0
      %624 = vmatpush.msra.mxu0 0.0
      %625 = vmatpush.msra.mxu0 0.0
      %626 = vmatpush.msra.mxu0 0.0
      %627 = vmatpush.msra.mxu0 0.0
      %628 = vmatpush.msra.mxu0 0.0
      %629 = vmatpush.msra.mxu0 0.0
      %630 = vmatpush.msra.mxu0 %v610
      %631 = vmatmul.f32.gmra.mxu0 %v613
      %v632 = vpop.f32.mrf.mxu0
      %v633 = vadd.f32 0.0, %v632
      %634 = vdwg.mxu0
      %635 = vrot.lane.b32.xlu0 %v232, 96
      %v636 = vpop.permute.xlu0 %635
      %v639 = vsel %vm468, %v552, 0
      %641 = vmatpush.msra.mxu0 0.0
      %642 = vmatpush.msra.mxu0 0.0
      %643 = vmatpush.msra.mxu0 0.0
      %644 = vmatpush.msra.mxu0 0.0
      %645 = vmatpush.msra.mxu0 0.0
      %646 = vmatpush.msra.mxu0 0.0
      %647 = vmatpush.msra.mxu0 0.0
      %648 = vmatpush.msra.mxu0 0.0
      %649 = vmatpush.msra.mxu0 0.0
      %650 = vmatpush.msra.mxu0 0.0
      %651 = vmatpush.msra.mxu0 0.0
      %652 = vmatpush.msra.mxu0 0.0
      %653 = vmatpush.msra.mxu0 0.0
      %654 = vmatpush.msra.mxu0 0.0
      %655 = vmatpush.msra.mxu0 0.0
      %656 = vmatpush.msra.mxu0 %v636
      %657 = vmatmul.f32.gmra.mxu0 %v639
      %v658 = vpop.f32.mrf.mxu0
      %v659 = vadd.f32 0.0, %v658
      %660 = vdwg.mxu0
      %661 = vrot.lane.b32.xlu0 %v234, 96
      %v662 = vpop.permute.xlu0 %661
      %v665 = vsel %vm468, %v553, 0
      %667 = vmatpush.msra.mxu0 0.0
      %668 = vmatpush.msra.mxu0 0.0
      %669 = vmatpush.msra.mxu0 0.0
      %670 = vmatpush.msra.mxu0 0.0
      %671 = vmatpush.msra.mxu0 0.0
      %672 = vmatpush.msra.mxu0 0.0
      %673 = vmatpush.msra.mxu0 0.0
      %674 = vmatpush.msra.mxu0 0.0
      %675 = vmatpush.msra.mxu0 0.0
      %676 = vmatpush.msra.mxu0 0.0
      %677 = vmatpush.msra.mxu0 0.0
      %678 = vmatpush.msra.mxu0 0.0
      %679 = vmatpush.msra.mxu0 0.0
      %680 = vmatpush.msra.mxu0 0.0
      %681 = vmatpush.msra.mxu0 0.0
      %682 = vmatpush.msra.mxu0 %v662
      %683 = vmatmul.f32.gmra.mxu0 %v665
      %v684 = vpop.f32.mrf.mxu0
      %v685 = vadd.f32 0.0, %v684
      %686 = vdwg.mxu0
      %687 = vrot.lane.b32.xlu0 %v236, 96
      %v688 = vpop.permute.xlu0 %687
      %v691 = vsel %vm468, %v554, 0
      %693 = vmatpush.msra.mxu0 0.0
      %694 = vmatpush.msra.mxu0 0.0
      %695 = vmatpush.msra.mxu0 0.0
      %696 = vmatpush.msra.mxu0 0.0
      %697 = vmatpush.msra.mxu0 0.0
      %698 = vmatpush.msra.mxu0 0.0
      %699 = vmatpush.msra.mxu0 0.0
      %700 = vmatpush.msra.mxu0 0.0
      %701 = vmatpush.msra.mxu0 0.0
      %702 = vmatpush.msra.mxu0 0.0
      %703 = vmatpush.msra.mxu0 0.0
      %704 = vmatpush.msra.mxu0 0.0
      %705 = vmatpush.msra.mxu0 0.0
      %706 = vmatpush.msra.mxu0 0.0
      %707 = vmatpush.msra.mxu0 0.0
      %708 = vmatpush.msra.mxu0 %v688
      %709 = vmatmul.f32.gmra.mxu0 %v691
      %v710 = vpop.f32.mrf.mxu0
      %v711 = vadd.f32 0.0, %v710
      %712 = vdwg.mxu0
      %713 = vrot.lane.b32.xlu0 %v238, 96
      %v714 = vpop.permute.xlu0 %713
      %v717 = vsel %vm468, %v555, 0
      %719 = vmatpush.msra.mxu0 0.0
      %720 = vmatpush.msra.mxu0 0.0
      %721 = vmatpush.msra.mxu0 0.0
      %722 = vmatpush.msra.mxu0 0.0
      %723 = vmatpush.msra.mxu0 0.0
      %724 = vmatpush.msra.mxu0 0.0
      %725 = vmatpush.msra.mxu0 0.0
      %726 = vmatpush.msra.mxu0 0.0
      %727 = vmatpush.msra.mxu0 0.0
      %728 = vmatpush.msra.mxu0 0.0
      %729 = vmatpush.msra.mxu0 0.0
      %730 = vmatpush.msra.mxu0 0.0
      %731 = vmatpush.msra.mxu0 0.0
      %732 = vmatpush.msra.mxu0 0.0
      %733 = vmatpush.msra.mxu0 0.0
      %734 = vmatpush.msra.mxu0 %v714
      %735 = vmatmul.f32.gmra.mxu0 %v717
      %v736 = vpop.f32.mrf.mxu0
      %v737 = vadd.f32 0.0, %v736
      %738 = vdwg.mxu0
      %739 = vrot.lane.b32.xlu0 %v240, 96
      %v740 = vpop.permute.xlu0 %739
      %v743 = vsel %vm468, %v556, 0
      %745 = vmatpush.msra.mxu0 0.0
      %746 = vmatpush.msra.mxu0 0.0
      %747 = vmatpush.msra.mxu0 0.0
      %748 = vmatpush.msra.mxu0 0.0
      %749 = vmatpush.msra.mxu0 0.0
      %750 = vmatpush.msra.mxu0 0.0
      %751 = vmatpush.msra.mxu0 0.0
      %752 = vmatpush.msra.mxu0 0.0
      %753 = vmatpush.msra.mxu0 0.0
      %754 = vmatpush.msra.mxu0 0.0
      %755 = vmatpush.msra.mxu0 0.0
      %756 = vmatpush.msra.mxu0 0.0
      %757 = vmatpush.msra.mxu0 0.0
      %758 = vmatpush.msra.mxu0 0.0
      %759 = vmatpush.msra.mxu0 0.0
      %760 = vmatpush.msra.mxu0 %v740
      %761 = vmatmul.f32.gmra.mxu0 %v743
      %v762 = vpop.f32.mrf.mxu0
      %v763 = vadd.f32 0.0, %v762
      %764 = vdwg.mxu0
      %767 = vrot.lane.b32.xlu0 %v633, 4
      %v768 = vpop.permute.xlu0 %767
      %769 = vrot.lane.b32.xlu0 %v659, 4
      %v770 = vpop.permute.xlu0 %769
      %775 = vrot.lane.b32.xlu0 %v685, 8
      %v776 = vpop.permute.xlu0 %775
      %777 = vrot.lane.b32.xlu0 %v711, 8
      %v778 = vpop.permute.xlu0 %777
      %783 = vrot.lane.b32.xlu0 %v737, 12
      %v784 = vpop.permute.xlu0 %783
      %785 = vrot.lane.b32.xlu0 %v763, 12
      %v786 = vpop.permute.xlu0 %785
      %v789 = vsel %vm243, %v581, %v768
      %v790 = vsel %vm243, %v607, %v770
      %v791 = vsel %vm468, %v789, %v776
      %v792 = vsel %vm468, %v790, %v778
      %vm793 = vcmask 97280
      %v794 = vsel %vm793, %v791, %v784
      %v795 = vsel %vm793, %v792, %v786
      %s796 = scalar_lea.vmem %s8, %s189
      %v797 = vld [vmem:[%s796] sm:$0xff]
      %v798 = vld [vmem:[%s796 + $0x8] sm:$0xff]
      %s799 = scalar_lea.vmem %s9, %s116
      %v800 = vld [vmem:[%s799] sm:$0x1]
      %v802 = vperm.slane %v800, 0
      %v805 = vsel %vm127, %v794, 0
      %v808 = vsel %vm127, %v795, 0
      %810 = vmatpush.msra.mxu0 0.0
      %811 = vmatpush.msra.mxu0 0.0
      %812 = vmatpush.msra.mxu0 0.0
      %813 = vmatpush.msra.mxu0 0.0
      %814 = vmatpush.msra.mxu0 0.0
      %815 = vmatpush.msra.mxu0 0.0
      %816 = vmatpush.msra.mxu0 0.0
      %817 = vmatpush.msra.mxu0 0.0
      %818 = vmatpush.msra.mxu0 0.0
      %819 = vmatpush.msra.mxu0 0.0
      %820 = vmatpush.msra.mxu0 0.0
      %821 = vmatpush.msra.mxu0 0.0
      %822 = vmatpush.msra.mxu0 0.0
      %823 = vmatpush.msra.mxu0 0.0
      %824 = vmatpush.msra.mxu0 %v798
      %825 = vmatpush.msra.mxu0 %v797
      %826 = vmatmul.f32.gmra.mxu0 %v805
      %v827 = vpop.f32.mrf.mxu0
      %v828 = vadd.f32 %v802, %v827
      %829 = vmatmul.f32.gmra.mxu0 %v808
      %v830 = vpop.f32.mrf.mxu0
      %v831 = vadd.f32 %v802, %v830
      %832 = vdwg.mxu0
      %v833 = vadd.f32 %v121, %v828
      %v834 = vadd.f32 %v122, %v831
      %s835 = scalar_lea.vmem %s10, %s116
      %v836 = vld [vmem:[%s835] sm:$0x1]
      %s837 = scalar_lea.vmem %s11, %s116
      %v838 = vld [vmem:[%s837] sm:$0x1]
      %v839 = vsel %vm127, %v833, 0.0
      %840 = vadd.xlane.f32.xlu0 %v839
      %v841 = vpop.xlane.xlu0 %840
      %v842 = vsel %vm127, %v834, 0.0
      %843 = vadd.xlane.f32.xlu0 %v842
      %v844 = vpop.xlane.xlu0 %843
      %v845 = vmul.f32 %v841, %v140
      %v846 = vmul.f32 %v844, %v140
      %v847 = vsub.f32 %v833, %v845
      %v848 = vsub.f32 %v834, %v846
      %v849 = vmul.f32 %v847, %v847
      %v850 = vmul.f32 %v848, %v848
      %v851 = vsel %vm127, %v849, 0.0
      %852 = vadd.xlane.f32.xlu0 %v851
      %v853 = vpop.xlane.xlu0 %852
      %v854 = vsel %vm127, %v850, 0.0
      %855 = vadd.xlane.f32.xlu0 %v854
      %v856 = vpop.xlane.xlu0 %855
      %v857 = vmul.f32 %v853, %v140
      %v858 = vmul.f32 %v856, %v140
      %v859 = vadd.f32 %v857, 1e-05
      %v860 = vadd.f32 %v858, 1e-05
      %v861 = vrsqrt.pop %v859
      %v862 = vmul.f32 %v861, %v859
      %v863 = vmul.f32 %v862, %v861
      %v864 = vmul.f32 0.5, %v863
      %v865 = vsub.f32 1.5, %v864
      %v866 = vmul.f32 %v861, %v865
      %vm867 = vweird.f32 %v859
      %vm868 = vweird.f32 %v861
      %vm869 = vmor %vm867, %vm868
      %v870 = vsel %vm869, %v861, %v866
      %v871 = vrsqrt.pop %v860
      %v872 = vmul.f32 %v871, %v860
      %v873 = vmul.f32 %v872, %v871
      %v874 = vmul.f32 0.5, %v873
      %v875 = vsub.f32 1.5, %v874
      %v876 = vmul.f32 %v871, %v875
      %vm877 = vweird.f32 %v860
      %vm878 = vweird.f32 %v871
      %vm879 = vmor %vm877, %vm878
      %v880 = vsel %vm879, %v871, %v876
      %v881 = vmul.f32 %v847, %v870
      %v882 = vmul.f32 %v848, %v880
      %v884 = vperm.slane %v836, 0
      %v886 = vmul.f32 %v881, %v884
      %v887 = vmul.f32 %v882, %v884
      %v889 = vperm.slane %v838, 0
      %v891 = vadd.f32 %v886, %v889
      %v892 = vadd.f32 %v887, %v889
      %s893 = scalar_lea.vmem %s12, %s189
      %v894 = vld [vmem:[%s893] sm:$0xff]
      %v895 = vld [vmem:[%s893 + $0x8] sm:$0xff]
      %s896 = scalar_lea.vmem %s13, %s116
      %v897 = vld [vmem:[%s896] sm:$0x1]
      %v899 = vperm.slane %v897, 0
      %v902 = vsel %vm127, %v891, 0
      %v905 = vsel %vm127, %v892, 0
      %907 = vmatpush.msra.mxu0 0.0
      %908 = vmatpush.msra.mxu0 0.0
      %909 = vmatpush.msra.mxu0 0.0
      %910 = vmatpush.msra.mxu0 0.0
      %911 = vmatpush.msra.mxu0 0.0
      %912 = vmatpush.msra.mxu0 0.0
      %913 = vmatpush.msra.mxu0 0.0
      %914 = vmatpush.msra.mxu0 0.0
      %915 = vmatpush.msra.mxu0 0.0
      %916 = vmatpush.msra.mxu0 0.0
      %917 = vmatpush.msra.mxu0 0.0
      %918 = vmatpush.msra.mxu0 0.0
      %919 = vmatpush.msra.mxu0 0.0
      %920 = vmatpush.msra.mxu0 0.0
      %921 = vmatpush.msra.mxu0 %v895
      %922 = vmatpush.msra.mxu0 %v894
      %923 = vmatmul.f32.gmra.mxu0 %v902
      %v924 = vpop.f32.mrf.mxu0
      %v925 = vadd.f32 %v899, %v924
      %926 = vmatmul.f32.gmra.mxu0 %v905
      %v927 = vpop.f32.mrf.mxu0
      %v928 = vadd.f32 %v899, %v927
      %929 = vdwg.mxu0
      %v930 = vmul.f32 %v925, 0.5
      %v931 = vmul.f32 %v928, 0.5
      %v932 = vmul.f32 %v925, 0.044715
      %v933 = vmul.f32 %v928, 0.044715
      %v934 = vmul.f32 %v932, %v925
      %v935 = vmul.f32 %v933, %v928
      %v936 = vmul.f32 %v934, %v925
      %v937 = vmul.f32 %v935, %v928
      %v938 = vadd.f32 %v925, %v936
      %v939 = vadd.f32 %v928, %v937
      %v940 = vmul.f32 %v938, 0.7978845
      %v941 = vmul.f32 %v939, 0.7978845
      %v942 = vtanh.pop %v940
      %v943 = vtanh.pop %v941
      %v944 = vadd.f32 %v942, 1.0
      %v945 = vadd.f32 %v943, 1.0
      %v946 = vmul.f32 %v930, %v944
      %v947 = vmul.f32 %v931, %v945
      %s948 = smul.u32 %s116, 64
      %s949 = scalar_lea.vmem %s14, %s948
      %v950 = vld [vmem:[%s949] sm:$0xff]
      %v951 = vld [vmem:[%s949 + $0x8] sm:$0xff]
      %v952 = vld [vmem:[%s949 + $0x10] sm:$0xff]
      %v953 = vld [vmem:[%s949 + $0x18] sm:$0xff]
      %v954 = vld [vmem:[%s949 + $0x20] sm:$0xff]
      %v955 = vld [vmem:[%s949 + $0x28] sm:$0xff]
      %v956 = vld [vmem:[%s949 + $0x30] sm:$0xff]
      %v957 = vld [vmem:[%s949 + $0x38] sm:$0xff]
      %s958 = scalar_lea.vmem %s15, %s116
      %v959 = vld [vmem:[%s958] sm:$0x1]
      %v961 = vperm.slane %v959, 0
      %vm963 = vcmask 523264
      %v965 = vsel %vm963, %v946, 0
      %v968 = vsel %vm963, %v947, 0
      %970 = vmatpush.msra.mxu0 0.0
      %971 = vmatpush.msra.mxu0 0.0
      %972 = vmatpush.msra.mxu0 0.0
      %973 = vmatpush.msra.mxu0 0.0
      %974 = vmatpush.msra.mxu0 0.0
      %975 = vmatpush.msra.mxu0 0.0
      %976 = vmatpush.msra.mxu0 0.0
      %977 = vmatpush.msra.mxu0 0.0
      %978 = vmatpush.msra.mxu0 %v957
      %979 = vmatpush.msra.mxu0 %v956
      %980 = vmatpush.msra.mxu0 %v955
      %981 = vmatpush.msra.mxu0 %v954
      %982 = vmatpush.msra.mxu0 %v953
      %983 = vmatpush.msra.mxu0 %v952
      %984 = vmatpush.msra.mxu0 %v951
      %985 = vmatpush.msra.mxu0 %v950
      %986 = vmatmul.f32.gmra.mxu0 %v965
      %v987 = vpop.f32.mrf.mxu0
      %v988 = vadd.f32 %v961, %v987
      %989 = vmatmul.f32.gmra.mxu0 %v968
      %v990 = vpop.f32.mrf.mxu0
      %v991 = vadd.f32 %v961, %v990
      %992 = vdwg.mxu0
      %v993 = vadd.f32 %v833, %v988
      %v994 = vadd.f32 %v834, %v991
    $region86: #{tpu_custom_call.1} parent=1 // loop_footer
      %s120 = sadd.s32 1, %s116
    $region87: #{tpu_custom_call.1} parent=1 // loop_footer_branch
      %115 = sbr.rel target = $region83
    $region88: #{tpu_custom_call.1} parent=1 // loop_exit
      _
    %v995 = vld [vmem:[%s16] sm:$0x1]
    %v996 = vld [vmem:[%s17] sm:$0x1]
    %vm997 = vcmask 130048
    %v998 = vsel %vm997, %v121, 0.0
    %999 = vadd.xlane.f32.xlu0 %v998
    %v1000 = vpop.xlane.xlu0 %999
    %v1001 = vsel %vm997, %v122, 0.0
    %1002 = vadd.xlane.f32.xlu0 %v1001
    %v1003 = vpop.xlane.xlu0 %1002
    %v1004 = vrcp.pop 16.0
    %v1005 = vmul.f32 16.0, %v1004
    %v1006 = vsub.f32 1.0, %v1005
    %v1007 = vmul.f32 %v1004, %v1006
    %v1008 = vadd.f32 %v1004, %v1007
    %vm1009 = vweird.f32 %v1004
    %v1010 = vsel %vm1009, %v1004, %v1008
    %v1011 = vmul.f32 %v1000, %v1010
    %v1012 = vmul.f32 %v1003, %v1010
    %v1013 = vsub.f32 %v121, %v1011
    %v1014 = vsub.f32 %v122, %v1012
    %v1015 = vmul.f32 %v1013, %v1013
    %v1016 = vmul.f32 %v1014, %v1014
    %v1017 = vsel %vm997, %v1015, 0.0
    %1018 = vadd.xlane.f32.xlu0 %v1017
    %v1019 = vpop.xlane.xlu0 %1018
    %v1020 = vsel %vm997, %v1016, 0.0
    %1021 = vadd.xlane.f32.xlu0 %v1020
    %v1022 = vpop.xlane.xlu0 %1021
    %v1023 = vmul.f32 %v1019, %v1010
    %v1024 = vmul.f32 %v1022, %v1010
    %v1025 = vadd.f32 %v1023, 1e-05
    %v1026 = vadd.f32 %v1024, 1e-05
    %v1027 = vrsqrt.pop %v1025
    %v1028 = vmul.f32 %v1027, %v1025
    %v1029 = vmul.f32 %v1028, %v1027
    %v1030 = vmul.f32 0.5, %v1029
    %v1031 = vsub.f32 1.5, %v1030
    %v1032 = vmul.f32 %v1027, %v1031
    %vm1033 = vweird.f32 %v1025
    %vm1034 = vweird.f32 %v1027
    %vm1035 = vmor %vm1033, %vm1034
    %v1036 = vsel %vm1035, %v1027, %v1032
    %v1037 = vrsqrt.pop %v1026
    %v1038 = vmul.f32 %v1037, %v1026
    %v1039 = vmul.f32 %v1038, %v1037
    %v1040 = vmul.f32 0.5, %v1039
    %v1041 = vsub.f32 1.5, %v1040
    %v1042 = vmul.f32 %v1037, %v1041
    %vm1043 = vweird.f32 %v1026
    %vm1044 = vweird.f32 %v1037
    %vm1045 = vmor %vm1043, %vm1044
    %v1046 = vsel %vm1045, %v1037, %v1042
    %v1047 = vmul.f32 %v1013, %v1036
    %v1048 = vmul.f32 %v1014, %v1046
    %v1050 = vperm.slane %v995, 0
    %v1052 = vmul.f32 %v1047, %v1050
    %v1053 = vmul.f32 %v1048, %v1050
    %v1055 = vperm.slane %v996, 0
    %v1057 = vadd.f32 %v1052, %v1055
    %v1058 = vadd.f32 %v1053, %v1055
    %v1059 = vld [vmem:[%s18] sm:$0xff]
    %v1060 = vld [vmem:[%s18 + $0x8] sm:$0xff]
    %v1061 = vld [vmem:[%s19] sm:$0x1]
    %v1063 = vperm.slane %v1061, 0
    %v1066 = vsel %vm997, %v1057, 0
    %v1069 = vsel %vm997, %v1058, 0
    %1071 = vmatpush.msra.mxu0 0.0
    %1072 = vmatpush.msra.mxu0 0.0
    %1073 = vmatpush.msra.mxu0 0.0
    %1074 = vmatpush.msra.mxu0 0.0
    %1075 = vmatpush.msra.mxu0 0.0
    %1076 = vmatpush.msra.mxu0 0.0
    %1077 = vmatpush.msra.mxu0 0.0
    %1078 = vmatpush.msra.mxu0 0.0
    %1079 = vmatpush.msra.mxu0 0.0
    %1080 = vmatpush.msra.mxu0 0.0
    %1081 = vmatpush.msra.mxu0 0.0
    %1082 = vmatpush.msra.mxu0 0.0
    %1083 = vmatpush.msra.mxu0 0.0
    %1084 = vmatpush.msra.mxu0 0.0
    %1085 = vmatpush.msra.mxu0 %v1060
    %1086 = vmatpush.msra.mxu0 %v1059
    %1087 = vmatmul.f32.gmra.mxu0 %v1066
    %v1088 = vpop.f32.mrf.mxu0
    %v1089 = vadd.f32 %v1063, %v1088
    %1090 = vmatmul.f32.gmra.mxu0 %v1069
    %v1091 = vpop.f32.mrf.mxu0
    %v1092 = vadd.f32 %v1063, %v1091
    %1093 = vdwg.mxu0
    %1094 = vst [vmem:[#allocation2] sm:$0xff] %v1089
    %1095 = vst [vmem:[#allocation2 + $0x8] sm:$0xff] %v1092
    // Predicated region
    $region89: #{tpu_custom_call.1} parent=1 // pred_check
      _
    $region90: #{tpu_custom_call.1} parent=1 // pred_check_branch
      %1097 = sbr.rel (0) target = $region92
    $region91: #{tpu_custom_call.1} parent=1 // pred_region
      %1099 = vsyncadd [#allocation3], 0
      %s1100 = sshll.u32 [#allocation2], 4
      %s1101 = int_to_ptr.vmem [resolvable:$true] %s1100
      %s1102 = sshll.u32 %s20, 4
      %s1103 = int_to_ptr.hbm [resolvable:$true] %s1102
      %1108 = dma.vmem_to_hbm [thread:$0]  %s1101, 256, %s1103, [#allocation3], 128, 128, 8
    $region92: #{tpu_custom_call.1} parent=1 // pred_fallthru
      _
    // Predicated region
    $region93: #{tpu_custom_call.1} parent=1 // pred_check
      _
    $region94: #{tpu_custom_call.1} parent=1 // pred_check_branch
      %1110 = sbr.rel (0) target = $region96
    $region95: #{tpu_custom_call.1} parent=1 // pred_region
      %1112 = dma.done [#allocation3], 256
    $region96: #{tpu_custom_call.1} parent=1 // pred_fallthru
      _
    %1113 = vsyncpa [#allocation3], 1

</llo_original>
